<compile_context>
chip_gen: v5e
topology: v5e:2x2
jax: 0.10.0
libtpu: 0.0.40
codegen_flags: <defaults>
</compile_context>

<pallas_src>
import functools
import numpy as np
import jax
import jax.numpy as jnp
from jax.experimental import pallas as pl
from jax.experimental.pallas import tpu as pltpu


def _adaptive_windows(out_len, size):
    """PyTorch adaptive pooling rule: start=floor(i*size/out), end=ceil((i+1)*size/out)."""
    i = np.arange(out_len)
    starts = (i * size) // out_len
    ends = ((i + 1) * size + out_len - 1) // out_len
    return starts, ends


def _largest_divisor_leq(n, cap):
    cap = max(1, min(n, cap))
    for d in range(cap, 0, -1):
        if n % d == 0:
            return d
    return 1


def _cutouts_kernel(x_ref, wxt_ref, wy_ref, scale_ref, o_ref, *, group, cs):
    # x_ref:     (nc_tile, H, W)     compute dtype (bf16/f32)
    # wxt_ref:   (W, G*cs)           0/1 indicators, pre-transposed -> canonical (K, N) rhs
    # wy_ref:    (G, cs, H)          0/1 indicators
    # scale_ref: (cs, G*cs)          f32 per-cell 1/(leny*lenx), laid out like the output
    # o_ref:     (nc_tile, cs, G*cs)
    x = x_ref[...]
    wxt = wxt_ref[...]

    # Matmul 1 (W-pooling): flat MXU matmul, M = nc_tile*H, K = W, N = G*cs.
    # Natural (lhs-free..., rhs-free) output layout -> no big relayout.
    t1 = jax.lax.dot_general(
        x, wxt, (((2,), (0,)), ((), ())),
        preferred_element_type=jnp.float32)          # (nc_tile, H, G*cs), f32
    t1 = t1.astype(x.dtype)                          # back to compute dtype for MXU pass 2

    outs = []
    for g in range(group):                           # static unroll, G is small
        wy_g = wy_ref[g]                             # (cs, H)
        t1_g = t1[:, :, g * cs:(g + 1) * cs]         # (nc_tile, H, cs) static slice
        # Matmul 2 (H-pooling): only the tiny (cs, nc_tile, cs) result gets relaid out.
        o_g = jnp.einsum("oh,chp->cop", wy_g, t1_g,
                         preferred_element_type=jnp.float32)   # (nc_tile, cs, cs) f32
        outs.append(o_g)
    res = outs[0] if group == 1 else jnp.concatenate(outs, axis=-1)  # (nc_tile, cs, G*cs)
    res = res * scale_ref[...][None]                 # exact f32 1/(leny*lenx), lane-dense
    o_ref[...] = res.astype(o_ref.dtype)             # single lane-dense store


def make_cutouts(x, cut_size, cutn, cut_pow=1.0, *, key,
                 compute_dtype=jnp.bfloat16):
    """x: (N, C, H, W) float array. Returns (cutn*N, C, cut_size, cut_size)."""
    N, C, sideY, sideX = x.shape
    cs = int(cut_size)
    NC = N * C
    max_size = min(sideX, sideY)
    min_size = min(sideX, sideY, cs)

    # ---- host glue: vectorized RNG, single device->host transfer ----
    r = np.asarray(jax.random.uniform(key, (3, cutn), dtype=jnp.float32))
    sizes = (r[0] ** cut_pow * (max_size - min_size) + min_size).astype(np.int64)
    offxs = (r[1] * (sideX - sizes + 1)).astype(np.int64)
    offys = (r[2] * (sideY - sizes + 1)).astype(np.int64)

    # ---- pooling operators: 0/1 indicators + f32 inverse-area scale ----
    wy01 = np.zeros((cutn, cs, sideY), np.float32)
    wxT01 = np.zeros((cutn, sideX, cs), np.float32)      # pre-transposed: (W, cs)
    scale = np.zeros((cutn, cs, cs), np.float32)
    for n in range(cutn):
        size, ox, oy = int(sizes[n]), int(offxs[n]), int(offys[n])
        ys, ye = _adaptive_windows(cs, size)
        xs, xe = _adaptive_windows(cs, size)
        for o in range(cs):
            wy01[n, o, oy + ys[o]: oy + ye[o]] = 1.0
        for p in range(cs):
            wxT01[n, ox + xs[p]: ox + xe[p], p] = 1.0
        scale[n] = np.outer(1.0 / (ye - ys), 1.0 / (xe - xs)).astype(np.float32)

    # ---- stack G cutouts per grid step so matmul-1's N-dim is ~128-256 lanes ----
    G = _largest_divisor_leq(cutn, max(1, 256 // cs))
    n_groups = cutn // G
    wy_g = jnp.asarray(wy01.reshape(n_groups, G, cs, sideY), dtype=compute_dtype)
    wxT_g = jnp.asarray(
        wxT01.reshape(n_groups, G, sideX, cs).transpose(0, 2, 1, 3)
             .reshape(n_groups, sideX, G * cs), dtype=compute_dtype)
    # scale laid out like the concatenated output: (n_groups, cs, G*cs)
    scale_g = jnp.asarray(
        scale.reshape(n_groups, G, cs, cs).transpose(0, 2, 1, 3)
             .reshape(n_groups, cs, G * cs), dtype=jnp.float32)

    # ---- NC tiling (outer grid axis) bounds VMEM for the image block ----
    itemsize = int(jnp.dtype(compute_dtype).itemsize)
    budget = 4 * 1024 * 1024                      # ~4 MiB for the double-buffered x block
    nc_cap = max(1, budget // (2 * sideY * sideX * itemsize))
    nc_tile = _largest_divisor_leq(NC, nc_cap)
    num_b = NC // nc_tile

    x_flat = x.reshape(NC, sideY, sideX).astype(compute_dtype)

    kernel = functools.partial(_cutouts_kernel, group=G, cs=cs)
    out_raw = pl.pallas_call(
        kernel,
        out_shape=jax.ShapeDtypeStruct((n_groups, NC, cs, G * cs), x.dtype),
        grid=(num_b, n_groups),
        in_specs=[
            # image tile: index depends only on the outer axis -> DMA'd once per NC tile
            pl.BlockSpec((nc_tile, sideY, sideX), lambda b, i: (b, 0, 0)),
            pl.BlockSpec((None, sideX, G * cs), lambda b, i: (i, 0, 0)),
            pl.BlockSpec((None, G, cs, sideY), lambda b, i: (i, 0, 0, 0)),
            pl.BlockSpec((None, cs, G * cs), lambda b, i: (i, 0, 0)),
        ],
        out_specs=pl.BlockSpec((None, nc_tile, cs, G * cs),
                               lambda b, i: (i, b, 0, 0)),
        compiler_params=pltpu.CompilerParams(
            dimension_semantics=("parallel", "parallel")),
    )(x_flat, wxT_g, wy_g, scale_g)

    # un-interleave the lane-stacked cutouts and restore torch.cat ordering
    out = out_raw.reshape(n_groups, NC, cs, G, cs)
    out = jnp.transpose(out, (0, 3, 1, 2, 4))            # (n_groups, G, NC, cs, cs)
    out = out.reshape(cutn, N, C, cs, cs).reshape(cutn * N, C, cs, cs)
    return out


if __name__ == "__main__":
    key = jax.random.PRNGKey(0)
    k_x, k_cut = jax.random.split(key)

    N, C, H, W = 2, 4, 16, 16
    cut_size, cutn, cut_pow = 8, 4, 1.0

    x = jax.random.normal(k_x, (N, C, H, W), dtype=jnp.float32)

    out = make_cutouts(x, cut_size, cutn, cut_pow, key=k_cut)
    out = jax.block_until_ready(out)

    assert out.shape == (cutn * N, C, cut_size, cut_size), out.shape
    assert out.dtype == x.dtype
    assert bool(jnp.all(jnp.isfinite(out)))

    # Every output value is an average of x over a crop window, so it must lie
    # within [min(x), max(x)] up to bf16 input-rounding slack.
    lo = float(jnp.min(x)) - 0.05
    hi = float(jnp.max(x)) + 0.05
    assert float(jnp.min(out)) >= lo and float(jnp.max(out)) <= hi

    print("KERNEL_OK")
</pallas_src>

<mosaic_0001>
module attributes {stable_mosaic.version = 11 : i64} {
  func.func @_cutouts_kernel(%arg0: i32, %arg1: i32, %arg2: memref<8x16x16xbf16, #tpu.memory_space<vmem>>, %arg3: memref<1x16x32xbf16, #tpu.memory_space<vmem>>, %arg4: memref<1x4x8x16xbf16, #tpu.memory_space<vmem>>, %arg5: memref<1x8x32xf32, #tpu.memory_space<vmem>>, %arg6: memref<1x8x8x32xf32, #tpu.memory_space<vmem>>) attributes {dimension_semantics = [#tpu.dimension_semantics<parallel>, #tpu.dimension_semantics<parallel>], iteration_bounds = array<i64: 1, 1>, scalar_prefetch = 0 : i64, scratch_operands = 0 : i64, tpu.core_type = #tpu.core_type<tc>, window_params = [{transform_indices = @transform_0, window_bounds = array<i64: 8, 16, 16>}, {transform_indices = @transform_1, window_bounds = array<i64: 1, 16, 32>}, {transform_indices = @transform_2, window_bounds = array<i64: 1, 4, 8, 16>}, {transform_indices = @transform_3, window_bounds = array<i64: 1, 8, 32>}, {transform_indices = @transform_4, window_bounds = array<i64: 1, 8, 8, 32>}]} {
    %c0 = arith.constant 0 : index
    %c0_0 = arith.constant 0 : index
    %c0_1 = arith.constant 0 : index
    %0 = vector.load %arg2[%c0, %c0_0, %c0_1] : memref<8x16x16xbf16, #tpu.memory_space<vmem>>, vector<8x16x16xbf16>
    %c0_2 = arith.constant 0 : index
    %c0_3 = arith.constant 0 : index
    %c0_4 = arith.constant 0 : index
    %1 = vector.load %arg3[%c0_2, %c0_3, %c0_4] : memref<1x16x32xbf16, #tpu.memory_space<vmem>>, vector<1x16x32xbf16>
    %2 = vector.shape_cast %1 : vector<1x16x32xbf16> to vector<16x32xbf16>
    %cst = arith.constant dense<0.000000e+00> : vector<8x16x32xf32>
    %3 = tpu.matmul %0, %2, %cst {dimension_numbers = #tpu.dot_dimension_numbers<[2], [0], [0, 1], [1], [0, 0, 0, 1, 1, 1], [], []>} : vector<8x16x16xbf16>, vector<16x32xbf16>, vector<8x16x32xf32> -> vector<8x16x32xf32>
    %4 = arith.truncf %3 : vector<8x16x32xf32> to vector<8x16x32xbf16>
    %c0_5 = arith.constant 0 : index
    %c0_6 = arith.constant 0 : index
    %c0_7 = arith.constant 0 : index
    %c0_8 = arith.constant 0 : index
    %5 = vector.load %arg4[%c0_5, %c0_6, %c0_7, %c0_8] : memref<1x4x8x16xbf16, #tpu.memory_space<vmem>>, vector<1x1x8x16xbf16>
    %6 = vector.shape_cast %5 : vector<1x1x8x16xbf16> to vector<8x16xbf16>
    %7 = vector.extract_strided_slice %4 {offsets = [0, 0, 0], sizes = [8, 16, 8], strides = [1, 1, 1]} : vector<8x16x32xbf16> to vector<8x16x8xbf16>
    "tpu.trace_start"() <{level = 10 : i32, message = "oh,chp->cop"}> : () -> ()
    %cst_9 = arith.constant dense<0.000000e+00> : vector<8x8x8xf32>
    %8 = tpu.matmul %7, %6, %cst_9 {dimension_numbers = #tpu.dot_dimension_numbers<[1], [1], [0, 2], [0], [0, 0, 0, 2, 1, 0], [], []>} : vector<8x16x8xbf16>, vector<8x16xbf16>, vector<8x8x8xf32> -> vector<8x8x8xf32>
    %9 = tpu.transpose %8, [0, 2, 1] : vector<8x8x8xf32> -> vector<8x8x8xf32>
    "tpu.trace_stop"() : () -> ()
    %c0_10 = arith.constant 0 : index
    %c1 = arith.constant 1 : index
    %c0_11 = arith.constant 0 : index
    %c0_12 = arith.constant 0 : index
    %10 = vector.load %arg4[%c0_10, %c1, %c0_11, %c0_12] : memref<1x4x8x16xbf16, #tpu.memory_space<vmem>>, vector<1x1x8x16xbf16>
    %11 = vector.shape_cast %10 : vector<1x1x8x16xbf16> to vector<8x16xbf16>
    %12 = vector.extract_strided_slice %4 {offsets = [0, 0, 8], sizes = [8, 16, 8], strides = [1, 1, 1]} : vector<8x16x32xbf16> to vector<8x16x8xbf16>
    "tpu.trace_start"() <{level = 10 : i32, message = "oh,chp->cop"}> : () -> ()
    %cst_13 = arith.constant dense<0.000000e+00> : vector<8x8x8xf32>
    %13 = tpu.matmul %12, %11, %cst_13 {dimension_numbers = #tpu.dot_dimension_numbers<[1], [1], [0, 2], [0], [0, 0, 0, 2, 1, 0], [], []>} : vector<8x16x8xbf16>, vector<8x16xbf16>, vector<8x8x8xf32> -> vector<8x8x8xf32>
    %14 = tpu.transpose %13, [0, 2, 1] : vector<8x8x8xf32> -> vector<8x8x8xf32>
    "tpu.trace_stop"() : () -> ()
    %c0_14 = arith.constant 0 : index
    %c2 = arith.constant 2 : index
    %c0_15 = arith.constant 0 : index
    %c0_16 = arith.constant 0 : index
    %15 = vector.load %arg4[%c0_14, %c2, %c0_15, %c0_16] : memref<1x4x8x16xbf16, #tpu.memory_space<vmem>>, vector<1x1x8x16xbf16>
    %16 = vector.shape_cast %15 : vector<1x1x8x16xbf16> to vector<8x16xbf16>
    %17 = vector.extract_strided_slice %4 {offsets = [0, 0, 16], sizes = [8, 16, 8], strides = [1, 1, 1]} : vector<8x16x32xbf16> to vector<8x16x8xbf16>
    "tpu.trace_start"() <{level = 10 : i32, message = "oh,chp->cop"}> : () -> ()
    %cst_17 = arith.constant dense<0.000000e+00> : vector<8x8x8xf32>
    %18 = tpu.matmul %17, %16, %cst_17 {dimension_numbers = #tpu.dot_dimension_numbers<[1], [1], [0, 2], [0], [0, 0, 0, 2, 1, 0], [], []>} : vector<8x16x8xbf16>, vector<8x16xbf16>, vector<8x8x8xf32> -> vector<8x8x8xf32>
    %19 = tpu.transpose %18, [0, 2, 1] : vector<8x8x8xf32> -> vector<8x8x8xf32>
    "tpu.trace_stop"() : () -> ()
    %c0_18 = arith.constant 0 : index
    %c3 = arith.constant 3 : index
    %c0_19 = arith.constant 0 : index
    %c0_20 = arith.constant 0 : index
    %20 = vector.load %arg4[%c0_18, %c3, %c0_19, %c0_20] : memref<1x4x8x16xbf16, #tpu.memory_space<vmem>>, vector<1x1x8x16xbf16>
    %21 = vector.shape_cast %20 : vector<1x1x8x16xbf16> to vector<8x16xbf16>
    %22 = vector.extract_strided_slice %4 {offsets = [0, 0, 24], sizes = [8, 16, 8], strides = [1, 1, 1]} : vector<8x16x32xbf16> to vector<8x16x8xbf16>
    "tpu.trace_start"() <{level = 10 : i32, message = "oh,chp->cop"}> : () -> ()
    %cst_21 = arith.constant dense<0.000000e+00> : vector<8x8x8xf32>
    %23 = tpu.matmul %22, %21, %cst_21 {dimension_numbers = #tpu.dot_dimension_numbers<[1], [1], [0, 2], [0], [0, 0, 0, 2, 1, 0], [], []>} : vector<8x16x8xbf16>, vector<8x16xbf16>, vector<8x8x8xf32> -> vector<8x8x8xf32>
    %24 = tpu.transpose %23, [0, 2, 1] : vector<8x8x8xf32> -> vector<8x8x8xf32>
    "tpu.trace_stop"() : () -> ()
    %25 = tpu.concatenate %9, %14, %19, %24 in 2 : vector<8x8x8xf32>, vector<8x8x8xf32>, vector<8x8x8xf32>, vector<8x8x8xf32> -> vector<8x8x32xf32>
    %c0_22 = arith.constant 0 : index
    %c0_23 = arith.constant 0 : index
    %c0_24 = arith.constant 0 : index
    %26 = vector.load %arg5[%c0_22, %c0_23, %c0_24] : memref<1x8x32xf32, #tpu.memory_space<vmem>>, vector<1x8x32xf32>
    %27 = vector.shape_cast %26 : vector<1x8x32xf32> to vector<8x32xf32>
    %28 = vector.shape_cast %27 : vector<8x32xf32> to vector<1x8x32xf32>
    %29 = vector.broadcast %28 : vector<1x8x32xf32> to vector<8x8x32xf32>
    %30 = arith.mulf %25, %29 : vector<8x8x32xf32>
    %c0_25 = arith.constant 0 : index
    %c0_26 = arith.constant 0 : index
    %c0_27 = arith.constant 0 : index
    %c0_28 = arith.constant 0 : index
    %31 = vector.load %arg6[%c0_25, %c0_26, %c0_27, %c0_28] : memref<1x8x8x32xf32, #tpu.memory_space<vmem>>, vector<1x8x8x32xf32>
    %32 = vector.shape_cast %31 : vector<1x8x8x32xf32> to vector<8x8x32xf32>
    %33 = vector.shape_cast %30 : vector<8x8x32xf32> to vector<1x8x8x32xf32>
    tpu.vector_store %arg6[%c0_25, %c0_26, %c0_27, %c0_28], %33 {strides = array<i32>} : memref<1x8x8x32xf32, #tpu.memory_space<vmem>>, vector<1x8x8x32xf32>,
    return
  }
  func.func @transform_0(%arg0: i32, %arg1: i32) -> (i32, i32, i32) {
    %c0_i32 = arith.constant 0 : i32
    %c0_i32_0 = arith.constant 0 : i32
    %c0_i32_1 = arith.constant 0 : i32
    return %arg0, %c0_i32, %c0_i32_0 : i32, i32, i32
  }
  func.func @transform_1(%arg0: i32, %arg1: i32) -> (i32, i32, i32) {
    %c0_i32 = arith.constant 0 : i32
    %c0_i32_0 = arith.constant 0 : i32
    %c0_i32_1 = arith.constant 0 : i32
    return %arg1, %c0_i32, %c0_i32_0 : i32, i32, i32
  }
  func.func @transform_2(%arg0: i32, %arg1: i32) -> (i32, i32, i32, i32) {
    %c0_i32 = arith.constant 0 : i32
    %c0_i32_0 = arith.constant 0 : i32
    %c0_i32_1 = arith.constant 0 : i32
    %c0_i32_2 = arith.constant 0 : i32
    return %arg1, %c0_i32, %c0_i32_0, %c0_i32_1 : i32, i32, i32, i32
  }
  func.func @transform_3(%arg0: i32, %arg1: i32) -> (i32, i32, i32) {
    %c0_i32 = arith.constant 0 : i32
    %c0_i32_0 = arith.constant 0 : i32
    %c0_i32_1 = arith.constant 0 : i32
    return %arg1, %c0_i32, %c0_i32_0 : i32, i32, i32
  }
  func.func @transform_4(%arg0: i32, %arg1: i32) -> (i32, i32, i32, i32) {
    %c0_i32 = arith.constant 0 : i32
    %c0_i32_0 = arith.constant 0 : i32
    %c0_i32_1 = arith.constant 0 : i32
    return %arg1, %arg0, %c0_i32, %c0_i32_0 : i32, i32, i32, i32
  }
}

</mosaic_0001>

<llo_original>
// kernel: tpu_custom_call.1
$region0: #{tpu_custom_call.1}
  #allocation0 [shape = 'u32[]', space=smem, size = 0x4, offset = 0x4, fixed_abs, tag = 'smem constant byte address 0x4 - core index']
  #allocation1 [shape = 'u32[72,128]{1,0:T(1,128)}', space=vmem, size = 0x9000, scoped, tag = 'internal scratch']
  %s0 = inlined_call_operand.hbm [shape: bf16[8,16,16], index: 0, kind: input, shape index: {}]
  %s1 = inlined_call_operand.hbm [shape: bf16[1,16,32], index: 1, kind: input, shape index: {}]
  %s2 = inlined_call_operand.hbm [shape: bf16[1,4,8,16], index: 2, kind: input, shape index: {}]
  %s3 = inlined_call_operand.hbm [shape: f32[1,8,32], index: 3, kind: input, shape index: {}]
  %s4 = inlined_call_operand.hbm [shape: f32[1,8,8,32], index: 4, kind: output, shape index: {}]
  %s5 = sld [smem:[#allocation0]]
  $region42: #{tpu_custom_call.1} parent=0
    _
  %s7 = ssub.s32 1, %s5
  %s8 = scalar_select 0, %s7, %s5
  $region1: #{tpu_custom_call.1} parent=0
    #allocation2 [shape = 'u8[32768]{0}', space=vmem, size = 0x8000, scoped, tag = 'input window, operand 0, single buffered']
    #allocation3 [shape = 's32[1]{0}', space=sflag, size = 0x4, scoped, tag = 'scoped memory for tpu_custom_call.1']
    #allocation4 [shape = 's32[1]{0}', space=sflag, size = 0x4, scoped, tag = 'scoped memory for tpu_custom_call.1']
    #allocation5 [shape = 'u8[4096]{0}', space=vmem, size = 0x1000, scoped, tag = 'input window, operand 1, single buffered']
    #allocation6 [shape = 's32[1]{0}', space=sflag, size = 0x4, scoped, tag = 'scoped memory for tpu_custom_call.1']
    #allocation7 [shape = 'u8[8192]{0}', space=vmem, size = 0x2000, scoped, tag = 'input window, operand 2, single buffered']
    #allocation8 [shape = 'u8[4096]{0}', space=vmem, size = 0x1000, scoped, tag = 'input window, operand 3, single buffered']
    #allocation9 [shape = 's32[1]{0}', space=sflag, size = 0x4, scoped, tag = 'scoped memory for tpu_custom_call.1']
    #allocation10 [shape = 'u8[32768]{0}', space=vmem, size = 0x8000, scoped, tag = 'output window, operand 0, single buffered']
    %9 = vsyncpa [#allocation3], 0
    %10 = vsyncpa [#allocation6], 0
    %11 = vsyncpa [#allocation9], 0
    %12 = vsyncpa [#allocation4], 0
    // Predicated region
    $region2: #{tpu_custom_call.1} parent=1 // pred_check
      _
    $region3: #{tpu_custom_call.1} parent=1 // pred_check_branch
      %14 = sbr.rel (0) target = $region5
    $region4: #{tpu_custom_call.1} parent=1 // pred_region
      %16 = vsyncadd [#allocation3], 0
      %s17 = sshll.u32 %s0, 4
      %s18 = int_to_ptr.hbm [resolvable:$true] %s17
      %s19 = sshll.u32 [#allocation2], 4
      %s20 = int_to_ptr.vmem [resolvable:$true] %s19
      %25 = dma.hbm_to_vmem [thread:$0]  %s18, 1024, %s20, [#allocation3], 64, 64, 4
    $region5: #{tpu_custom_call.1} parent=1 // pred_fallthru
      _
    // Predicated region
    $region6: #{tpu_custom_call.1} parent=1 // pred_check
      _
    $region7: #{tpu_custom_call.1} parent=1 // pred_check_branch
      %27 = sbr.rel (0) target = $region9
    $region8: #{tpu_custom_call.1} parent=1 // pred_region
      %29 = vsyncadd [#allocation6], 0
      %s30 = sshll.u32 %s1, 4
      %s31 = int_to_ptr.hbm [resolvable:$true] %s30
      %s32 = sshll.u32 [#allocation5], 4
      %s33 = int_to_ptr.vmem [resolvable:$true] %s32
      %38 = dma.hbm_to_vmem [thread:$0]  %s31, 128, %s33, [#allocation6], 64, 64, 4
    $region9: #{tpu_custom_call.1} parent=1 // pred_fallthru
      _
    // Predicated region
    $region10: #{tpu_custom_call.1} parent=1 // pred_check
      _
    $region11: #{tpu_custom_call.1} parent=1 // pred_check_branch
      %40 = sbr.rel (0) target = $region13
    $region12: #{tpu_custom_call.1} parent=1 // pred_region
      %42 = vsyncadd [#allocation6], 0
      %s43 = sshll.u32 %s2, 4
      %s44 = int_to_ptr.hbm [resolvable:$true] %s43
      %s45 = sshll.u32 [#allocation7], 4
      %s46 = int_to_ptr.vmem [resolvable:$true] %s45
      %51 = dma.hbm_to_vmem [thread:$0]  %s44, 256, %s46, [#allocation6], 64, 64, 4
    $region13: #{tpu_custom_call.1} parent=1 // pred_fallthru
      _
    // Predicated region
    $region14: #{tpu_custom_call.1} parent=1 // pred_check
      _
    $region15: #{tpu_custom_call.1} parent=1 // pred_check_branch
      %53 = sbr.rel (0) target = $region17
    $region16: #{tpu_custom_call.1} parent=1 // pred_region
      %55 = vsyncadd [#allocation9], 0
      %s57 = sshll.u32 %s3, 4
      %s58 = int_to_ptr.hbm [resolvable:$true] %s57
      %s59 = sshll.u32 [#allocation8], 4
      %s60 = int_to_ptr.vmem [resolvable:$true] %s59
      %62 = dma.hbm_to_vmem [thread:$0]  %s58, 128, %s60, [#allocation9]
    $region17: #{tpu_custom_call.1} parent=1 // pred_fallthru
      _
    // Predicated region
    $region18: #{tpu_custom_call.1} parent=1 // pred_check
      _
    $region19: #{tpu_custom_call.1} parent=1 // pred_check_branch
      %64 = sbr.rel (0) target = $region21
    $region20: #{tpu_custom_call.1} parent=1 // pred_region
      %66 = dma.done [#allocation3], 1024
    $region21: #{tpu_custom_call.1} parent=1 // pred_fallthru
      _
    // Predicated region
    $region22: #{tpu_custom_call.1} parent=1 // pred_check
      _
    $region23: #{tpu_custom_call.1} parent=1 // pred_check_branch
      %68 = sbr.rel (0) target = $region25
    $region24: #{tpu_custom_call.1} parent=1 // pred_region
      %70 = dma.done [#allocation6], 128
    $region25: #{tpu_custom_call.1} parent=1 // pred_fallthru
      _
    // Predicated region
    $region26: #{tpu_custom_call.1} parent=1 // pred_check
      _
    $region27: #{tpu_custom_call.1} parent=1 // pred_check_branch
      %72 = sbr.rel (0) target = $region29
    $region28: #{tpu_custom_call.1} parent=1 // pred_region
      %74 = dma.done [#allocation6], 256
    $region29: #{tpu_custom_call.1} parent=1 // pred_fallthru
      _
    // Predicated region
    $region30: #{tpu_custom_call.1} parent=1 // pred_check
      _
    $region31: #{tpu_custom_call.1} parent=1 // pred_check_branch
      %76 = sbr.rel (0) target = $region33
    $region32: #{tpu_custom_call.1} parent=1 // pred_region
      %78 = dma.done [#allocation9], 128
    $region33: #{tpu_custom_call.1} parent=1 // pred_fallthru
      _
    %v80 = vld [vmem:[#allocation2] sm:$0xf]
    %v81 = vld [vmem:[#allocation2 + $0x4] sm:$0xf]
    %v82 = vld [vmem:[#allocation2 + $0x8] sm:$0xf]
    %v83 = vld [vmem:[#allocation2 + $0xc] sm:$0xf]
    %v84 = vld [vmem:[#allocation2 + $0x10] sm:$0xf]
    %v85 = vld [vmem:[#allocation2 + $0x14] sm:$0xf]
    %v86 = vld [vmem:[#allocation2 + $0x18] sm:$0xf]
    %v87 = vld [vmem:[#allocation2 + $0x1c] sm:$0xf]
    %v88 = vld [vmem:[#allocation2 + $0x20] sm:$0xf]
    %v89 = vld [vmem:[#allocation2 + $0x24] sm:$0xf]
    %v90 = vld [vmem:[#allocation2 + $0x28] sm:$0xf]
    %v91 = vld [vmem:[#allocation2 + $0x2c] sm:$0xf]
    %v92 = vld [vmem:[#allocation2 + $0x30] sm:$0xf]
    %v93 = vld [vmem:[#allocation2 + $0x34] sm:$0xf]
    %v94 = vld [vmem:[#allocation2 + $0x38] sm:$0xf]
    %v95 = vld [vmem:[#allocation2 + $0x3c] sm:$0xf]
    %v96 = vld [vmem:[#allocation5] sm:$0xf]
    %v97 = vld [vmem:[#allocation5 + $0x4] sm:$0xf]
    %v114 = vunpack.c.l.b16 %v80
    %v115 = vunpack.c.l.b16 %v81
    %v116 = vunpack.c.l.b16 %v82
    %v117 = vunpack.c.l.b16 %v83
    %v118 = vunpack.c.l.b16 %v84
    %v119 = vunpack.c.l.b16 %v85
    %v120 = vunpack.c.l.b16 %v86
    %v121 = vunpack.c.l.b16 %v87
    %v122 = vunpack.c.l.b16 %v88
    %v123 = vunpack.c.l.b16 %v89
    %v124 = vunpack.c.l.b16 %v90
    %v125 = vunpack.c.l.b16 %v91
    %v126 = vunpack.c.l.b16 %v92
    %v127 = vunpack.c.l.b16 %v93
    %v128 = vunpack.c.l.b16 %v94
    %v129 = vunpack.c.l.b16 %v95
    %v130 = vpack.c.b16 %v115, %v114
    %v131 = vpack.c.b16 %v117, %v116
    %v132 = vpack.c.b16 %v119, %v118
    %v133 = vpack.c.b16 %v121, %v120
    %v134 = vpack.c.b16 %v123, %v122
    %v135 = vpack.c.b16 %v125, %v124
    %v136 = vpack.c.b16 %v127, %v126
    %v137 = vpack.c.b16 %v129, %v128
    %v140 = vunpack.c.l.b16 %v96
    %v141 = vunpack.c.l.b16 %v97
    %v142 = vpack.c.b16 %v141, %v140
    %vm144 = vcmask 130048
    %v146 = vsel %vm144, %v130, 0
    %v149 = vsel %vm144, %v131, 0
    %v152 = vsel %vm144, %v132, 0
    %v155 = vsel %vm144, %v133, 0
    %v158 = vsel %vm144, %v134, 0
    %v161 = vsel %vm144, %v135, 0
    %v164 = vsel %vm144, %v136, 0
    %v167 = vsel %vm144, %v137, 0
    %169 = vmatpush.bf16.msra.mxu0 0
    %170 = vmatpush.bf16.msra.mxu0 0
    %171 = vmatpush.bf16.msra.mxu0 0
    %172 = vmatpush.bf16.msra.mxu0 0
    %173 = vmatpush.bf16.msra.mxu0 0
    %174 = vmatpush.bf16.msra.mxu0 0
    %175 = vmatpush.bf16.msra.mxu0 0
    %176 = vmatpush.bf16.msra.mxu0 %v142
    %177 = vmatmul.bf16.gmra.mxu0 %v146
    %v178 = vpop.f32.mrf.mxu0
    %v179 = vadd.f32 0.0, %v178
    %v180 = vpop.f32.mrf.mxu0
    %v181 = vadd.f32 0.0, %v180
    %182 = vmatmul.bf16.gmra.mxu0 %v149
    %v183 = vpop.f32.mrf.mxu0
    %v184 = vadd.f32 0.0, %v183
    %v185 = vpop.f32.mrf.mxu0
    %v186 = vadd.f32 0.0, %v185
    %187 = vmatmul.bf16.gmra.mxu0 %v152
    %v188 = vpop.f32.mrf.mxu0
    %v189 = vadd.f32 0.0, %v188
    %v190 = vpop.f32.mrf.mxu0
    %v191 = vadd.f32 0.0, %v190
    %192 = vmatmul.bf16.gmra.mxu0 %v155
    %v193 = vpop.f32.mrf.mxu0
    %v194 = vadd.f32 0.0, %v193
    %v195 = vpop.f32.mrf.mxu0
    %v196 = vadd.f32 0.0, %v195
    %197 = vmatmul.bf16.gmra.mxu0 %v158
    %v198 = vpop.f32.mrf.mxu0
    %v199 = vadd.f32 0.0, %v198
    %v200 = vpop.f32.mrf.mxu0
    %v201 = vadd.f32 0.0, %v200
    %202 = vmatmul.bf16.gmra.mxu0 %v161
    %v203 = vpop.f32.mrf.mxu0
    %v204 = vadd.f32 0.0, %v203
    %v205 = vpop.f32.mrf.mxu0
    %v206 = vadd.f32 0.0, %v205
    %207 = vmatmul.bf16.gmra.mxu0 %v164
    %v208 = vpop.f32.mrf.mxu0
    %v209 = vadd.f32 0.0, %v208
    %v210 = vpop.f32.mrf.mxu0
    %v211 = vadd.f32 0.0, %v210
    %212 = vmatmul.bf16.gmra.mxu0 %v167
    %v213 = vpop.f32.mrf.mxu0
    %v214 = vadd.f32 0.0, %v213
    %v215 = vpop.f32.mrf.mxu0
    %v216 = vadd.f32 0.0, %v215
    %217 = vdwg.mxu0
    %v218 = vpack.c.bf16 %v179, %v179
    %v219 = vpack.c.bf16 %v181, %v181
    %v220 = vpack.c.bf16 %v184, %v184
    %v221 = vpack.c.bf16 %v186, %v186
    %v222 = vpack.c.bf16 %v189, %v189
    %v223 = vpack.c.bf16 %v191, %v191
    %v224 = vpack.c.bf16 %v194, %v194
    %v225 = vpack.c.bf16 %v196, %v196
    %v226 = vpack.c.bf16 %v199, %v199
    %v227 = vpack.c.bf16 %v201, %v201
    %v228 = vpack.c.bf16 %v204, %v204
    %v229 = vpack.c.bf16 %v206, %v206
    %v230 = vpack.c.bf16 %v209, %v209
    %v231 = vpack.c.bf16 %v211, %v211
    %v232 = vpack.c.bf16 %v214, %v214
    %v233 = vpack.c.bf16 %v216, %v216
    %v234 = vld [vmem:[#allocation7] sm:$0xf]
    %v251 = vunpack.c.l.b16 %v218
    %v252 = vunpack.c.l.b16 %v219
    %v253 = vunpack.c.l.b16 %v220
    %v254 = vunpack.c.l.b16 %v221
    %v255 = vunpack.c.l.b16 %v222
    %v256 = vunpack.c.l.b16 %v223
    %v257 = vunpack.c.l.b16 %v224
    %v258 = vunpack.c.l.b16 %v225
    %v259 = vunpack.c.l.b16 %v226
    %v260 = vunpack.c.l.b16 %v227
    %v261 = vunpack.c.l.b16 %v228
    %v262 = vunpack.c.l.b16 %v229
    %v263 = vunpack.c.l.b16 %v230
    %v264 = vunpack.c.l.b16 %v231
    %v265 = vunpack.c.l.b16 %v232
    %v266 = vunpack.c.l.b16 %v233
    %v267 = vpack.c.b16 %v252, %v251
    %v268 = vpack.c.b16 %v254, %v253
    %v269 = vpack.c.b16 %v256, %v255
    %v270 = vpack.c.b16 %v258, %v257
    %v271 = vpack.c.b16 %v260, %v259
    %v272 = vpack.c.b16 %v262, %v261
    %v273 = vpack.c.b16 %v264, %v263
    %v274 = vpack.c.b16 %v266, %v265
    %283 = vxpose.xlu0.c.b16.start [1/8] %v267, 128
    %284 = vxpose.xlu0.c.b16.cont [2/8] 0, 128
    %285 = vxpose.xlu0.c.b16.cont [3/8] 0, 128
    %286 = vxpose.xlu0.c.b16.cont [4/8] 0, 128
    %287 = vxpose.xlu0.c.b16.cont [5/8] 0, 128
    %288 = vxpose.xlu0.c.b16.cont [6/8] 0, 128
    %289 = vxpose.xlu0.c.b16.cont [7/8] 0, 128
    %290 = vxpose.xlu0.c.b16.end [8/8] 0, 128
    %v291 = vpop.trf.xlu0
    %v292 = vpop.trf.xlu0
    %v293 = vpop.trf.xlu0
    %v294 = vpop.trf.xlu0
    %v295 = vpop.trf.xlu0
    %v296 = vpop.trf.xlu0
    %v297 = vpop.trf.xlu0
    %v298 = vpop.trf.xlu0
    %299 = vxpose.xlu0.c.b16.start [1/8] %v268, 128
    %300 = vxpose.xlu0.c.b16.cont [2/8] 0, 128
    %301 = vxpose.xlu0.c.b16.cont [3/8] 0, 128
    %302 = vxpose.xlu0.c.b16.cont [4/8] 0, 128
    %303 = vxpose.xlu0.c.b16.cont [5/8] 0, 128
    %304 = vxpose.xlu0.c.b16.cont [6/8] 0, 128
    %305 = vxpose.xlu0.c.b16.cont [7/8] 0, 128
    %306 = vxpose.xlu0.c.b16.end [8/8] 0, 128
    %v307 = vpop.trf.xlu0
    %v308 = vpop.trf.xlu0
    %v309 = vpop.trf.xlu0
    %v310 = vpop.trf.xlu0
    %v311 = vpop.trf.xlu0
    %v312 = vpop.trf.xlu0
    %v313 = vpop.trf.xlu0
    %v314 = vpop.trf.xlu0
    %315 = vxpose.xlu0.c.b16.start [1/8] %v269, 128
    %316 = vxpose.xlu0.c.b16.cont [2/8] 0, 128
    %317 = vxpose.xlu0.c.b16.cont [3/8] 0, 128
    %318 = vxpose.xlu0.c.b16.cont [4/8] 0, 128
    %319 = vxpose.xlu0.c.b16.cont [5/8] 0, 128
    %320 = vxpose.xlu0.c.b16.cont [6/8] 0, 128
    %321 = vxpose.xlu0.c.b16.cont [7/8] 0, 128
    %322 = vxpose.xlu0.c.b16.end [8/8] 0, 128
    %v323 = vpop.trf.xlu0
    %v324 = vpop.trf.xlu0
    %v325 = vpop.trf.xlu0
    %v326 = vpop.trf.xlu0
    %v327 = vpop.trf.xlu0
    %v328 = vpop.trf.xlu0
    %v329 = vpop.trf.xlu0
    %v330 = vpop.trf.xlu0
    %331 = vxpose.xlu0.c.b16.start [1/8] %v270, 128
    %332 = vxpose.xlu0.c.b16.cont [2/8] 0, 128
    %333 = vxpose.xlu0.c.b16.cont [3/8] 0, 128
    %334 = vxpose.xlu0.c.b16.cont [4/8] 0, 128
    %335 = vxpose.xlu0.c.b16.cont [5/8] 0, 128
    %336 = vxpose.xlu0.c.b16.cont [6/8] 0, 128
    %337 = vxpose.xlu0.c.b16.cont [7/8] 0, 128
    %338 = vxpose.xlu0.c.b16.end [8/8] 0, 128
    %v339 = vpop.trf.xlu0
    %v340 = vpop.trf.xlu0
    %v341 = vpop.trf.xlu0
    %v342 = vpop.trf.xlu0
    %v343 = vpop.trf.xlu0
    %v344 = vpop.trf.xlu0
    %v345 = vpop.trf.xlu0
    %v346 = vpop.trf.xlu0
    %347 = vxpose.xlu0.c.b16.start [1/8] %v271, 128
    %348 = vxpose.xlu0.c.b16.cont [2/8] 0, 128
    %349 = vxpose.xlu0.c.b16.cont [3/8] 0, 128
    %350 = vxpose.xlu0.c.b16.cont [4/8] 0, 128
    %351 = vxpose.xlu0.c.b16.cont [5/8] 0, 128
    %352 = vxpose.xlu0.c.b16.cont [6/8] 0, 128
    %353 = vxpose.xlu0.c.b16.cont [7/8] 0, 128
    %354 = vxpose.xlu0.c.b16.end [8/8] 0, 128
    %v355 = vpop.trf.xlu0
    %v356 = vpop.trf.xlu0
    %v357 = vpop.trf.xlu0
    %v358 = vpop.trf.xlu0
    %v359 = vpop.trf.xlu0
    %v360 = vpop.trf.xlu0
    %v361 = vpop.trf.xlu0
    %v362 = vpop.trf.xlu0
    %363 = vxpose.xlu0.c.b16.start [1/8] %v272, 128
    %364 = vxpose.xlu0.c.b16.cont [2/8] 0, 128
    %365 = vxpose.xlu0.c.b16.cont [3/8] 0, 128
    %366 = vxpose.xlu0.c.b16.cont [4/8] 0, 128
    %367 = vxpose.xlu0.c.b16.cont [5/8] 0, 128
    %368 = vxpose.xlu0.c.b16.cont [6/8] 0, 128
    %369 = vxpose.xlu0.c.b16.cont [7/8] 0, 128
    %370 = vxpose.xlu0.c.b16.end [8/8] 0, 128
    %v371 = vpop.trf.xlu0
    %v372 = vpop.trf.xlu0
    %v373 = vpop.trf.xlu0
    %v374 = vpop.trf.xlu0
    %v375 = vpop.trf.xlu0
    %v376 = vpop.trf.xlu0
    %v377 = vpop.trf.xlu0
    %v378 = vpop.trf.xlu0
    %379 = vxpose.xlu0.c.b16.start [1/8] %v273, 128
    %380 = vxpose.xlu0.c.b16.cont [2/8] 0, 128
    %381 = vxpose.xlu0.c.b16.cont [3/8] 0, 128
    %382 = vxpose.xlu0.c.b16.cont [4/8] 0, 128
    %383 = vxpose.xlu0.c.b16.cont [5/8] 0, 128
    %384 = vxpose.xlu0.c.b16.cont [6/8] 0, 128
    %385 = vxpose.xlu0.c.b16.cont [7/8] 0, 128
    %386 = vxpose.xlu0.c.b16.end [8/8] 0, 128
    %v387 = vpop.trf.xlu0
    %v388 = vpop.trf.xlu0
    %v389 = vpop.trf.xlu0
    %v390 = vpop.trf.xlu0
    %v391 = vpop.trf.xlu0
    %v392 = vpop.trf.xlu0
    %v393 = vpop.trf.xlu0
    %v394 = vpop.trf.xlu0
    %395 = vxpose.xlu0.c.b16.start [1/8] %v274, 128
    %396 = vxpose.xlu0.c.b16.cont [2/8] 0, 128
    %397 = vxpose.xlu0.c.b16.cont [3/8] 0, 128
    %398 = vxpose.xlu0.c.b16.cont [4/8] 0, 128
    %399 = vxpose.xlu0.c.b16.cont [5/8] 0, 128
    %400 = vxpose.xlu0.c.b16.cont [6/8] 0, 128
    %401 = vxpose.xlu0.c.b16.cont [7/8] 0, 128
    %402 = vxpose.xlu0.c.b16.end [8/8] 0, 128
    %v403 = vpop.trf.xlu0
    %v404 = vpop.trf.xlu0
    %v405 = vpop.trf.xlu0
    %v406 = vpop.trf.xlu0
    %v407 = vpop.trf.xlu0
    %v408 = vpop.trf.xlu0
    %v409 = vpop.trf.xlu0
    %v410 = vpop.trf.xlu0
    %v419 = vunpack.c.l.b16 %v291
    %v420 = vunpack.c.l.b16 %v307
    %v421 = vunpack.c.l.b16 %v323
    %v422 = vunpack.c.l.b16 %v339
    %v423 = vunpack.c.l.b16 %v355
    %v424 = vunpack.c.l.b16 %v371
    %v425 = vunpack.c.l.b16 %v387
    %v426 = vunpack.c.l.b16 %v403
    %v427 = vpack.c.b16 %v420, %v419
    %v428 = vpack.c.b16 %v422, %v421
    %v429 = vpack.c.b16 %v424, %v423
    %v430 = vpack.c.b16 %v426, %v425
    %v432 = vsel %vm144, %v427, 0
    %v435 = vsel %vm144, %v428, 0
    %v438 = vsel %vm144, %v429, 0
    %v441 = vsel %vm144, %v430, 0
    %v444 = vsel %vm144, %v234, 0
    %446 = vmatpush.bf16.xpose.msra.mxu0 0
    %447 = vmatpush.bf16.xpose.msra.mxu0 0
    %448 = vmatpush.bf16.xpose.msra.mxu0 0
    %449 = vmatpush.bf16.xpose.msra.mxu0 0
    %450 = vmatpush.bf16.xpose.msra.mxu0 0
    %451 = vmatpush.bf16.xpose.msra.mxu0 0
    %452 = vmatpush.bf16.xpose.msra.mxu0 0
    %453 = vmatpush.bf16.xpose.msra.mxu0 %v444
    %454 = vmatmul.bf16.gmra.mxu0 %v432
    %v455 = vpop.f32.mrf.mxu0
    %v456 = vadd.f32 0.0, %v455
    %v457 = vpop.f32.mrf.mxu0
    %v458 = vadd.f32 0.0, %v457
    %459 = vmatmul.bf16.gmra.mxu0 %v435
    %v460 = vpop.f32.mrf.mxu0
    %v461 = vadd.f32 0.0, %v460
    %v462 = vpop.f32.mrf.mxu0
    %v463 = vadd.f32 0.0, %v462
    %464 = vmatmul.bf16.gmra.mxu0 %v438
    %v465 = vpop.f32.mrf.mxu0
    %v466 = vadd.f32 0.0, %v465
    %v467 = vpop.f32.mrf.mxu0
    %v468 = vadd.f32 0.0, %v467
    %469 = vmatmul.bf16.gmra.mxu0 %v441
    %v470 = vpop.f32.mrf.mxu0
    %v471 = vadd.f32 0.0, %v470
    %v472 = vpop.f32.mrf.mxu0
    %v473 = vadd.f32 0.0, %v472
    %474 = vdwg.mxu0
    %475 = vxpose.xlu0.b32.start [1/16] %v456, 128
    %476 = vxpose.xlu0.b32.cont [2/16] 0.0, 128
    %477 = vxpose.xlu0.b32.cont [3/16] 0.0, 128
    %478 = vxpose.xlu0.b32.cont [4/16] 0.0, 128
    %479 = vxpose.xlu0.b32.cont [5/16] 0.0, 128
    %480 = vxpose.xlu0.b32.cont [6/16] 0.0, 128
    %481 = vxpose.xlu0.b32.cont [7/16] 0.0, 128
    %482 = vxpose.xlu0.b32.cont [8/16] 0.0, 128
    %483 = vxpose.xlu0.b32.cont [9/16] 0.0, 128
    %484 = vxpose.xlu0.b32.cont [10/16] 0.0, 128
    %485 = vxpose.xlu0.b32.cont [11/16] 0.0, 128
    %486 = vxpose.xlu0.b32.cont [12/16] 0.0, 128
    %487 = vxpose.xlu0.b32.cont [13/16] 0.0, 128
    %488 = vxpose.xlu0.b32.cont [14/16] 0.0, 128
    %489 = vxpose.xlu0.b32.cont [15/16] 0.0, 128
    %490 = vxpose.xlu0.b32.end [16/16] 0.0, 128
    %v491 = vpop.trf.xlu0
    %v492 = vpop.trf.xlu0
    %v493 = vpop.trf.xlu0
    %v494 = vpop.trf.xlu0
    %v495 = vpop.trf.xlu0
    %v496 = vpop.trf.xlu0
    %v497 = vpop.trf.xlu0
    %v498 = vpop.trf.xlu0
    %v499 = vpop.trf.xlu0
    %v500 = vpop.trf.xlu0
    %v501 = vpop.trf.xlu0
    %v502 = vpop.trf.xlu0
    %v503 = vpop.trf.xlu0
    %v504 = vpop.trf.xlu0
    %v505 = vpop.trf.xlu0
    %v506 = vpop.trf.xlu0
    %507 = vxpose.xlu0.b32.start [1/16] %v458, 128
    %508 = vxpose.xlu0.b32.cont [2/16] 0.0, 128
    %509 = vxpose.xlu0.b32.cont [3/16] 0.0, 128
    %510 = vxpose.xlu0.b32.cont [4/16] 0.0, 128
    %511 = vxpose.xlu0.b32.cont [5/16] 0.0, 128
    %512 = vxpose.xlu0.b32.cont [6/16] 0.0, 128
    %513 = vxpose.xlu0.b32.cont [7/16] 0.0, 128
    %514 = vxpose.xlu0.b32.cont [8/16] 0.0, 128
    %515 = vxpose.xlu0.b32.cont [9/16] 0.0, 128
    %516 = vxpose.xlu0.b32.cont [10/16] 0.0, 128
    %517 = vxpose.xlu0.b32.cont [11/16] 0.0, 128
    %518 = vxpose.xlu0.b32.cont [12/16] 0.0, 128
    %519 = vxpose.xlu0.b32.cont [13/16] 0.0, 128
    %520 = vxpose.xlu0.b32.cont [14/16] 0.0, 128
    %521 = vxpose.xlu0.b32.cont [15/16] 0.0, 128
    %522 = vxpose.xlu0.b32.end [16/16] 0.0, 128
    %v523 = vpop.trf.xlu0
    %v524 = vpop.trf.xlu0
    %v525 = vpop.trf.xlu0
    %v526 = vpop.trf.xlu0
    %v527 = vpop.trf.xlu0
    %v528 = vpop.trf.xlu0
    %v529 = vpop.trf.xlu0
    %v530 = vpop.trf.xlu0
    %v531 = vpop.trf.xlu0
    %v532 = vpop.trf.xlu0
    %v533 = vpop.trf.xlu0
    %v534 = vpop.trf.xlu0
    %v535 = vpop.trf.xlu0
    %v536 = vpop.trf.xlu0
    %v537 = vpop.trf.xlu0
    %v538 = vpop.trf.xlu0
    %539 = vxpose.xlu0.b32.start [1/16] %v461, 128
    %540 = vxpose.xlu0.b32.cont [2/16] 0.0, 128
    %541 = vxpose.xlu0.b32.cont [3/16] 0.0, 128
    %542 = vxpose.xlu0.b32.cont [4/16] 0.0, 128
    %543 = vxpose.xlu0.b32.cont [5/16] 0.0, 128
    %544 = vxpose.xlu0.b32.cont [6/16] 0.0, 128
    %545 = vxpose.xlu0.b32.cont [7/16] 0.0, 128
    %546 = vxpose.xlu0.b32.cont [8/16] 0.0, 128
    %547 = vxpose.xlu0.b32.cont [9/16] 0.0, 128
    %548 = vxpose.xlu0.b32.cont [10/16] 0.0, 128
    %549 = vxpose.xlu0.b32.cont [11/16] 0.0, 128
    %550 = vxpose.xlu0.b32.cont [12/16] 0.0, 128
    %551 = vxpose.xlu0.b32.cont [13/16] 0.0, 128
    %552 = vxpose.xlu0.b32.cont [14/16] 0.0, 128
    %553 = vxpose.xlu0.b32.cont [15/16] 0.0, 128
    %554 = vxpose.xlu0.b32.end [16/16] 0.0, 128
    %v555 = vpop.trf.xlu0
    %v556 = vpop.trf.xlu0
    %v557 = vpop.trf.xlu0
    %v558 = vpop.trf.xlu0
    %v559 = vpop.trf.xlu0
    %v560 = vpop.trf.xlu0
    %v561 = vpop.trf.xlu0
    %v562 = vpop.trf.xlu0
    %v563 = vpop.trf.xlu0
    %v564 = vpop.trf.xlu0
    %v565 = vpop.trf.xlu0
    %v566 = vpop.trf.xlu0
    %v567 = vpop.trf.xlu0
    %v568 = vpop.trf.xlu0
    %v569 = vpop.trf.xlu0
    %v570 = vpop.trf.xlu0
    %571 = vxpose.xlu0.b32.start [1/16] %v463, 128
    %572 = vxpose.xlu0.b32.cont [2/16] 0.0, 128
    %573 = vxpose.xlu0.b32.cont [3/16] 0.0, 128
    %574 = vxpose.xlu0.b32.cont [4/16] 0.0, 128
    %575 = vxpose.xlu0.b32.cont [5/16] 0.0, 128
    %576 = vxpose.xlu0.b32.cont [6/16] 0.0, 128
    %577 = vxpose.xlu0.b32.cont [7/16] 0.0, 128
    %578 = vxpose.xlu0.b32.cont [8/16] 0.0, 128
    %579 = vxpose.xlu0.b32.cont [9/16] 0.0, 128
    %580 = vxpose.xlu0.b32.cont [10/16] 0.0, 128
    %581 = vxpose.xlu0.b32.cont [11/16] 0.0, 128
    %582 = vxpose.xlu0.b32.cont [12/16] 0.0, 128
    %583 = vxpose.xlu0.b32.cont [13/16] 0.0, 128
    %584 = vxpose.xlu0.b32.cont [14/16] 0.0, 128
    %585 = vxpose.xlu0.b32.cont [15/16] 0.0, 128
    %586 = vxpose.xlu0.b32.end [16/16] 0.0, 128
    %v587 = vpop.trf.xlu0
    %v588 = vpop.trf.xlu0
    %v589 = vpop.trf.xlu0
    %v590 = vpop.trf.xlu0
    %v591 = vpop.trf.xlu0
    %v592 = vpop.trf.xlu0
    %v593 = vpop.trf.xlu0
    %v594 = vpop.trf.xlu0
    %v595 = vpop.trf.xlu0
    %v596 = vpop.trf.xlu0
    %v597 = vpop.trf.xlu0
    %v598 = vpop.trf.xlu0
    %v599 = vpop.trf.xlu0
    %v600 = vpop.trf.xlu0
    %v601 = vpop.trf.xlu0
    %v602 = vpop.trf.xlu0
    %603 = vxpose.xlu0.b32.start [1/16] %v466, 128
    %604 = vxpose.xlu0.b32.cont [2/16] 0.0, 128
    %605 = vxpose.xlu0.b32.cont [3/16] 0.0, 128
    %606 = vxpose.xlu0.b32.cont [4/16] 0.0, 128
    %607 = vxpose.xlu0.b32.cont [5/16] 0.0, 128
    %608 = vxpose.xlu0.b32.cont [6/16] 0.0, 128
    %609 = vxpose.xlu0.b32.cont [7/16] 0.0, 128
    %610 = vxpose.xlu0.b32.cont [8/16] 0.0, 128
    %611 = vxpose.xlu0.b32.cont [9/16] 0.0, 128
    %612 = vxpose.xlu0.b32.cont [10/16] 0.0, 128
    %613 = vxpose.xlu0.b32.cont [11/16] 0.0, 128
    %614 = vxpose.xlu0.b32.cont [12/16] 0.0, 128
    %615 = vxpose.xlu0.b32.cont [13/16] 0.0, 128
    %616 = vxpose.xlu0.b32.cont [14/16] 0.0, 128
    %617 = vxpose.xlu0.b32.cont [15/16] 0.0, 128
    %618 = vxpose.xlu0.b32.end [16/16] 0.0, 128
    %v619 = vpop.trf.xlu0
    %v620 = vpop.trf.xlu0
    %v621 = vpop.trf.xlu0
    %v622 = vpop.trf.xlu0
    %v623 = vpop.trf.xlu0
    %v624 = vpop.trf.xlu0
    %v625 = vpop.trf.xlu0
    %v626 = vpop.trf.xlu0
    %v627 = vpop.trf.xlu0
    %v628 = vpop.trf.xlu0
    %v629 = vpop.trf.xlu0
    %v630 = vpop.trf.xlu0
    %v631 = vpop.trf.xlu0
    %v632 = vpop.trf.xlu0
    %v633 = vpop.trf.xlu0
    %v634 = vpop.trf.xlu0
    %635 = vxpose.xlu0.b32.start [1/16] %v468, 128
    %636 = vxpose.xlu0.b32.cont [2/16] 0.0, 128
    %637 = vxpose.xlu0.b32.cont [3/16] 0.0, 128
    %638 = vxpose.xlu0.b32.cont [4/16] 0.0, 128
    %639 = vxpose.xlu0.b32.cont [5/16] 0.0, 128
    %640 = vxpose.xlu0.b32.cont [6/16] 0.0, 128
    %641 = vxpose.xlu0.b32.cont [7/16] 0.0, 128
    %642 = vxpose.xlu0.b32.cont [8/16] 0.0, 128
    %643 = vxpose.xlu0.b32.cont [9/16] 0.0, 128
    %644 = vxpose.xlu0.b32.cont [10/16] 0.0, 128
    %645 = vxpose.xlu0.b32.cont [11/16] 0.0, 128
    %646 = vxpose.xlu0.b32.cont [12/16] 0.0, 128
    %647 = vxpose.xlu0.b32.cont [13/16] 0.0, 128
    %648 = vxpose.xlu0.b32.cont [14/16] 0.0, 128
    %649 = vxpose.xlu0.b32.cont [15/16] 0.0, 128
    %650 = vxpose.xlu0.b32.end [16/16] 0.0, 128
    %v651 = vpop.trf.xlu0
    %v652 = vpop.trf.xlu0
    %v653 = vpop.trf.xlu0
    %v654 = vpop.trf.xlu0
    %v655 = vpop.trf.xlu0
    %v656 = vpop.trf.xlu0
    %v657 = vpop.trf.xlu0
    %v658 = vpop.trf.xlu0
    %v659 = vpop.trf.xlu0
    %v660 = vpop.trf.xlu0
    %v661 = vpop.trf.xlu0
    %v662 = vpop.trf.xlu0
    %v663 = vpop.trf.xlu0
    %v664 = vpop.trf.xlu0
    %v665 = vpop.trf.xlu0
    %v666 = vpop.trf.xlu0
    %667 = vxpose.xlu0.b32.start [1/16] %v471, 128
    %668 = vxpose.xlu0.b32.cont [2/16] 0.0, 128
    %669 = vxpose.xlu0.b32.cont [3/16] 0.0, 128
    %670 = vxpose.xlu0.b32.cont [4/16] 0.0, 128
    %671 = vxpose.xlu0.b32.cont [5/16] 0.0, 128
    %672 = vxpose.xlu0.b32.cont [6/16] 0.0, 128
    %673 = vxpose.xlu0.b32.cont [7/16] 0.0, 128
    %674 = vxpose.xlu0.b32.cont [8/16] 0.0, 128
    %675 = vxpose.xlu0.b32.cont [9/16] 0.0, 128
    %676 = vxpose.xlu0.b32.cont [10/16] 0.0, 128
    %677 = vxpose.xlu0.b32.cont [11/16] 0.0, 128
    %678 = vxpose.xlu0.b32.cont [12/16] 0.0, 128
    %679 = vxpose.xlu0.b32.cont [13/16] 0.0, 128
    %680 = vxpose.xlu0.b32.cont [14/16] 0.0, 128
    %681 = vxpose.xlu0.b32.cont [15/16] 0.0, 128
    %682 = vxpose.xlu0.b32.end [16/16] 0.0, 128
    %v683 = vpop.trf.xlu0
    %v684 = vpop.trf.xlu0
    %v685 = vpop.trf.xlu0
    %v686 = vpop.trf.xlu0
    %v687 = vpop.trf.xlu0
    %v688 = vpop.trf.xlu0
    %v689 = vpop.trf.xlu0
    %v690 = vpop.trf.xlu0
    %v691 = vpop.trf.xlu0
    %v692 = vpop.trf.xlu0
    %v693 = vpop.trf.xlu0
    %v694 = vpop.trf.xlu0
    %v695 = vpop.trf.xlu0
    %v696 = vpop.trf.xlu0
    %v697 = vpop.trf.xlu0
    %v698 = vpop.trf.xlu0
    %699 = vxpose.xlu0.b32.start [1/16] %v473, 128
    %700 = vxpose.xlu0.b32.cont [2/16] 0.0, 128
    %701 = vxpose.xlu0.b32.cont [3/16] 0.0, 128
    %702 = vxpose.xlu0.b32.cont [4/16] 0.0, 128
    %703 = vxpose.xlu0.b32.cont [5/16] 0.0, 128
    %704 = vxpose.xlu0.b32.cont [6/16] 0.0, 128
    %705 = vxpose.xlu0.b32.cont [7/16] 0.0, 128
    %706 = vxpose.xlu0.b32.cont [8/16] 0.0, 128
    %707 = vxpose.xlu0.b32.cont [9/16] 0.0, 128
    %708 = vxpose.xlu0.b32.cont [10/16] 0.0, 128
    %709 = vxpose.xlu0.b32.cont [11/16] 0.0, 128
    %710 = vxpose.xlu0.b32.cont [12/16] 0.0, 128
    %711 = vxpose.xlu0.b32.cont [13/16] 0.0, 128
    %712 = vxpose.xlu0.b32.cont [14/16] 0.0, 128
    %713 = vxpose.xlu0.b32.cont [15/16] 0.0, 128
    %714 = vxpose.xlu0.b32.end [16/16] 0.0, 128
    %v715 = vpop.trf.xlu0
    %v716 = vpop.trf.xlu0
    %v717 = vpop.trf.xlu0
    %v718 = vpop.trf.xlu0
    %v719 = vpop.trf.xlu0
    %v720 = vpop.trf.xlu0
    %v721 = vpop.trf.xlu0
    %v722 = vpop.trf.xlu0
    %v723 = vpop.trf.xlu0
    %v724 = vpop.trf.xlu0
    %v725 = vpop.trf.xlu0
    %v726 = vpop.trf.xlu0
    %v727 = vpop.trf.xlu0
    %v728 = vpop.trf.xlu0
    %v729 = vpop.trf.xlu0
    %v730 = vpop.trf.xlu0
    %s731 = scalar_lea.vmem [#allocation7], 4
    %v732 = vld [vmem:[%s731] sm:$0xf]
    %733 = vrot.lane.b32.xlu0 %v267, 120
    %v734 = vpop.permute.xlu0 %733
    %735 = vrot.lane.b32.xlu0 %v268, 120
    %v736 = vpop.permute.xlu0 %735
    %737 = vrot.lane.b32.xlu0 %v269, 120
    %v738 = vpop.permute.xlu0 %737
    %739 = vrot.lane.b32.xlu0 %v270, 120
    %v740 = vpop.permute.xlu0 %739
    %741 = vrot.lane.b32.xlu0 %v271, 120
    %v742 = vpop.permute.xlu0 %741
    %743 = vrot.lane.b32.xlu0 %v272, 120
    %v744 = vpop.permute.xlu0 %743
    %745 = vrot.lane.b32.xlu0 %v273, 120
    %v746 = vpop.permute.xlu0 %745
    %747 = vrot.lane.b32.xlu0 %v274, 120
    %v748 = vpop.permute.xlu0 %747
    %757 = vxpose.xlu0.c.b16.start [1/8] %v734, 128
    %758 = vxpose.xlu0.c.b16.cont [2/8] 0, 128
    %759 = vxpose.xlu0.c.b16.cont [3/8] 0, 128
    %760 = vxpose.xlu0.c.b16.cont [4/8] 0, 128
    %761 = vxpose.xlu0.c.b16.cont [5/8] 0, 128
    %762 = vxpose.xlu0.c.b16.cont [6/8] 0, 128
    %763 = vxpose.xlu0.c.b16.cont [7/8] 0, 128
    %764 = vxpose.xlu0.c.b16.end [8/8] 0, 128
    %v765 = vpop.trf.xlu0
    %v766 = vpop.trf.xlu0
    %v767 = vpop.trf.xlu0
    %v768 = vpop.trf.xlu0
    %v769 = vpop.trf.xlu0
    %v770 = vpop.trf.xlu0
    %v771 = vpop.trf.xlu0
    %v772 = vpop.trf.xlu0
    %773 = vxpose.xlu0.c.b16.start [1/8] %v736, 128
    %774 = vxpose.xlu0.c.b16.cont [2/8] 0, 128
    %775 = vxpose.xlu0.c.b16.cont [3/8] 0, 128
    %776 = vxpose.xlu0.c.b16.cont [4/8] 0, 128
    %777 = vxpose.xlu0.c.b16.cont [5/8] 0, 128
    %778 = vxpose.xlu0.c.b16.cont [6/8] 0, 128
    %779 = vxpose.xlu0.c.b16.cont [7/8] 0, 128
    %780 = vxpose.xlu0.c.b16.end [8/8] 0, 128
    %v781 = vpop.trf.xlu0
    %v782 = vpop.trf.xlu0
    %v783 = vpop.trf.xlu0
    %v784 = vpop.trf.xlu0
    %v785 = vpop.trf.xlu0
    %v786 = vpop.trf.xlu0
    %v787 = vpop.trf.xlu0
    %v788 = vpop.trf.xlu0
    %789 = vxpose.xlu0.c.b16.start [1/8] %v738, 128
    %790 = vxpose.xlu0.c.b16.cont [2/8] 0, 128
    %791 = vxpose.xlu0.c.b16.cont [3/8] 0, 128
    %792 = vxpose.xlu0.c.b16.cont [4/8] 0, 128
    %793 = vxpose.xlu0.c.b16.cont [5/8] 0, 128
    %794 = vxpose.xlu0.c.b16.cont [6/8] 0, 128
    %795 = vxpose.xlu0.c.b16.cont [7/8] 0, 128
    %796 = vxpose.xlu0.c.b16.end [8/8] 0, 128
    %v797 = vpop.trf.xlu0
    %v798 = vpop.trf.xlu0
    %v799 = vpop.trf.xlu0
    %v800 = vpop.trf.xlu0
    %v801 = vpop.trf.xlu0
    %v802 = vpop.trf.xlu0
    %v803 = vpop.trf.xlu0
    %v804 = vpop.trf.xlu0
    %805 = vxpose.xlu0.c.b16.start [1/8] %v740, 128
    %806 = vxpose.xlu0.c.b16.cont [2/8] 0, 128
    %807 = vxpose.xlu0.c.b16.cont [3/8] 0, 128
    %808 = vxpose.xlu0.c.b16.cont [4/8] 0, 128
    %809 = vxpose.xlu0.c.b16.cont [5/8] 0, 128
    %810 = vxpose.xlu0.c.b16.cont [6/8] 0, 128
    %811 = vxpose.xlu0.c.b16.cont [7/8] 0, 128
    %812 = vxpose.xlu0.c.b16.end [8/8] 0, 128
    %v813 = vpop.trf.xlu0
    %v814 = vpop.trf.xlu0
    %v815 = vpop.trf.xlu0
    %v816 = vpop.trf.xlu0
    %v817 = vpop.trf.xlu0
    %v818 = vpop.trf.xlu0
    %v819 = vpop.trf.xlu0
    %v820 = vpop.trf.xlu0
    %821 = vxpose.xlu0.c.b16.start [1/8] %v742, 128
    %822 = vxpose.xlu0.c.b16.cont [2/8] 0, 128
    %823 = vxpose.xlu0.c.b16.cont [3/8] 0, 128
    %824 = vxpose.xlu0.c.b16.cont [4/8] 0, 128
    %825 = vxpose.xlu0.c.b16.cont [5/8] 0, 128
    %826 = vxpose.xlu0.c.b16.cont [6/8] 0, 128
    %827 = vxpose.xlu0.c.b16.cont [7/8] 0, 128
    %828 = vxpose.xlu0.c.b16.end [8/8] 0, 128
    %v829 = vpop.trf.xlu0
    %v830 = vpop.trf.xlu0
    %v831 = vpop.trf.xlu0
    %v832 = vpop.trf.xlu0
    %v833 = vpop.trf.xlu0
    %v834 = vpop.trf.xlu0
    %v835 = vpop.trf.xlu0
    %v836 = vpop.trf.xlu0
    %837 = vxpose.xlu0.c.b16.start [1/8] %v744, 128
    %838 = vxpose.xlu0.c.b16.cont [2/8] 0, 128
    %839 = vxpose.xlu0.c.b16.cont [3/8] 0, 128
    %840 = vxpose.xlu0.c.b16.cont [4/8] 0, 128
    %841 = vxpose.xlu0.c.b16.cont [5/8] 0, 128
    %842 = vxpose.xlu0.c.b16.cont [6/8] 0, 128
    %843 = vxpose.xlu0.c.b16.cont [7/8] 0, 128
    %844 = vxpose.xlu0.c.b16.end [8/8] 0, 128
    %v845 = vpop.trf.xlu0
    %v846 = vpop.trf.xlu0
    %v847 = vpop.trf.xlu0
    %v848 = vpop.trf.xlu0
    %v849 = vpop.trf.xlu0
    %v850 = vpop.trf.xlu0
    %v851 = vpop.trf.xlu0
    %v852 = vpop.trf.xlu0
    %853 = vxpose.xlu0.c.b16.start [1/8] %v746, 128
    %854 = vxpose.xlu0.c.b16.cont [2/8] 0, 128
    %855 = vxpose.xlu0.c.b16.cont [3/8] 0, 128
    %856 = vxpose.xlu0.c.b16.cont [4/8] 0, 128
    %857 = vxpose.xlu0.c.b16.cont [5/8] 0, 128
    %858 = vxpose.xlu0.c.b16.cont [6/8] 0, 128
    %859 = vxpose.xlu0.c.b16.cont [7/8] 0, 128
    %860 = vxpose.xlu0.c.b16.end [8/8] 0, 128
    %v861 = vpop.trf.xlu0
    %v862 = vpop.trf.xlu0
    %v863 = vpop.trf.xlu0
    %v864 = vpop.trf.xlu0
    %v865 = vpop.trf.xlu0
    %v866 = vpop.trf.xlu0
    %v867 = vpop.trf.xlu0
    %v868 = vpop.trf.xlu0
    %869 = vxpose.xlu0.c.b16.start [1/8] %v748, 128
    %870 = vxpose.xlu0.c.b16.cont [2/8] 0, 128
    %871 = vxpose.xlu0.c.b16.cont [3/8] 0, 128
    %872 = vxpose.xlu0.c.b16.cont [4/8] 0, 128
    %873 = vxpose.xlu0.c.b16.cont [5/8] 0, 128
    %874 = vxpose.xlu0.c.b16.cont [6/8] 0, 128
    %875 = vxpose.xlu0.c.b16.cont [7/8] 0, 128
    %876 = vxpose.xlu0.c.b16.end [8/8] 0, 128
    %v877 = vpop.trf.xlu0
    %v878 = vpop.trf.xlu0
    %v879 = vpop.trf.xlu0
    %v880 = vpop.trf.xlu0
    %v881 = vpop.trf.xlu0
    %v882 = vpop.trf.xlu0
    %v883 = vpop.trf.xlu0
    %v884 = vpop.trf.xlu0
    %v893 = vunpack.c.l.b16 %v765
    %v894 = vunpack.c.l.b16 %v781
    %v895 = vunpack.c.l.b16 %v797
    %v896 = vunpack.c.l.b16 %v813
    %v897 = vunpack.c.l.b16 %v829
    %v898 = vunpack.c.l.b16 %v845
    %v899 = vunpack.c.l.b16 %v861
    %v900 = vunpack.c.l.b16 %v877
    %v901 = vpack.c.b16 %v894, %v893
    %v902 = vpack.c.b16 %v896, %v895
    %v903 = vpack.c.b16 %v898, %v897
    %v904 = vpack.c.b16 %v900, %v899
    %v906 = vsel %vm144, %v901, 0
    %v909 = vsel %vm144, %v902, 0
    %v912 = vsel %vm144, %v903, 0
    %v915 = vsel %vm144, %v904, 0
    %v918 = vsel %vm144, %v732, 0
    %920 = vmatpush.bf16.xpose.msra.mxu0 0
    %921 = vmatpush.bf16.xpose.msra.mxu0 0
    %922 = vmatpush.bf16.xpose.msra.mxu0 0
    %923 = vmatpush.bf16.xpose.msra.mxu0 0
    %924 = vmatpush.bf16.xpose.msra.mxu0 0
    %925 = vmatpush.bf16.xpose.msra.mxu0 0
    %926 = vmatpush.bf16.xpose.msra.mxu0 0
    %927 = vmatpush.bf16.xpose.msra.mxu0 %v918
    %928 = vmatmul.bf16.gmra.mxu0 %v906
    %v929 = vpop.f32.mrf.mxu0
    %v930 = vadd.f32 0.0, %v929
    %v931 = vpop.f32.mrf.mxu0
    %v932 = vadd.f32 0.0, %v931
    %933 = vmatmul.bf16.gmra.mxu0 %v909
    %v934 = vpop.f32.mrf.mxu0
    %v935 = vadd.f32 0.0, %v934
    %v936 = vpop.f32.mrf.mxu0
    %v937 = vadd.f32 0.0, %v936
    %938 = vmatmul.bf16.gmra.mxu0 %v912
    %v939 = vpop.f32.mrf.mxu0
    %v940 = vadd.f32 0.0, %v939
    %v941 = vpop.f32.mrf.mxu0
    %v942 = vadd.f32 0.0, %v941
    %943 = vmatmul.bf16.gmra.mxu0 %v915
    %v944 = vpop.f32.mrf.mxu0
    %v945 = vadd.f32 0.0, %v944
    %v946 = vpop.f32.mrf.mxu0
    %v947 = vadd.f32 0.0, %v946
    %948 = vdwg.mxu0
    %949 = vxpose.xlu0.b32.start [1/16] %v930, 128
    %950 = vxpose.xlu0.b32.cont [2/16] 0.0, 128
    %951 = vxpose.xlu0.b32.cont [3/16] 0.0, 128
    %952 = vxpose.xlu0.b32.cont [4/16] 0.0, 128
    %953 = vxpose.xlu0.b32.cont [5/16] 0.0, 128
    %954 = vxpose.xlu0.b32.cont [6/16] 0.0, 128
    %955 = vxpose.xlu0.b32.cont [7/16] 0.0, 128
    %956 = vxpose.xlu0.b32.cont [8/16] 0.0, 128
    %957 = vxpose.xlu0.b32.cont [9/16] 0.0, 128
    %958 = vxpose.xlu0.b32.cont [10/16] 0.0, 128
    %959 = vxpose.xlu0.b32.cont [11/16] 0.0, 128
    %960 = vxpose.xlu0.b32.cont [12/16] 0.0, 128
    %961 = vxpose.xlu0.b32.cont [13/16] 0.0, 128
    %962 = vxpose.xlu0.b32.cont [14/16] 0.0, 128
    %963 = vxpose.xlu0.b32.cont [15/16] 0.0, 128
    %964 = vxpose.xlu0.b32.end [16/16] 0.0, 128
    %v965 = vpop.trf.xlu0
    %v966 = vpop.trf.xlu0
    %v967 = vpop.trf.xlu0
    %v968 = vpop.trf.xlu0
    %v969 = vpop.trf.xlu0
    %v970 = vpop.trf.xlu0
    %v971 = vpop.trf.xlu0
    %v972 = vpop.trf.xlu0
    %v973 = vpop.trf.xlu0
    %v974 = vpop.trf.xlu0
    %v975 = vpop.trf.xlu0
    %v976 = vpop.trf.xlu0
    %v977 = vpop.trf.xlu0
    %v978 = vpop.trf.xlu0
    %v979 = vpop.trf.xlu0
    %v980 = vpop.trf.xlu0
    %981 = vxpose.xlu0.b32.start [1/16] %v932, 128
    %982 = vxpose.xlu0.b32.cont [2/16] 0.0, 128
    %983 = vxpose.xlu0.b32.cont [3/16] 0.0, 128
    %984 = vxpose.xlu0.b32.cont [4/16] 0.0, 128
    %985 = vxpose.xlu0.b32.cont [5/16] 0.0, 128
    %986 = vxpose.xlu0.b32.cont [6/16] 0.0, 128
    %987 = vxpose.xlu0.b32.cont [7/16] 0.0, 128
    %988 = vxpose.xlu0.b32.cont [8/16] 0.0, 128
    %989 = vxpose.xlu0.b32.cont [9/16] 0.0, 128
    %990 = vxpose.xlu0.b32.cont [10/16] 0.0, 128
    %991 = vxpose.xlu0.b32.cont [11/16] 0.0, 128
    %992 = vxpose.xlu0.b32.cont [12/16] 0.0, 128
    %993 = vxpose.xlu0.b32.cont [13/16] 0.0, 128
    %994 = vxpose.xlu0.b32.cont [14/16] 0.0, 128
    %995 = vxpose.xlu0.b32.cont [15/16] 0.0, 128
    %996 = vxpose.xlu0.b32.end [16/16] 0.0, 128
    %v997 = vpop.trf.xlu0
    %v998 = vpop.trf.xlu0
    %v999 = vpop.trf.xlu0
    %v1000 = vpop.trf.xlu0
    %v1001 = vpop.trf.xlu0
    %v1002 = vpop.trf.xlu0
    %v1003 = vpop.trf.xlu0
    %v1004 = vpop.trf.xlu0
    %v1005 = vpop.trf.xlu0
    %v1006 = vpop.trf.xlu0
    %v1007 = vpop.trf.xlu0
    %v1008 = vpop.trf.xlu0
    %v1009 = vpop.trf.xlu0
    %v1010 = vpop.trf.xlu0
    %v1011 = vpop.trf.xlu0
    %v1012 = vpop.trf.xlu0
    %1013 = vxpose.xlu0.b32.start [1/16] %v935, 128
    %1014 = vxpose.xlu0.b32.cont [2/16] 0.0, 128
    %1015 = vxpose.xlu0.b32.cont [3/16] 0.0, 128
    %1016 = vxpose.xlu0.b32.cont [4/16] 0.0, 128
    %1017 = vxpose.xlu0.b32.cont [5/16] 0.0, 128
    %1018 = vxpose.xlu0.b32.cont [6/16] 0.0, 128
    %1019 = vxpose.xlu0.b32.cont [7/16] 0.0, 128
    %1020 = vxpose.xlu0.b32.cont [8/16] 0.0, 128
    %1021 = vxpose.xlu0.b32.cont [9/16] 0.0, 128
    %1022 = vxpose.xlu0.b32.cont [10/16] 0.0, 128
    %1023 = vxpose.xlu0.b32.cont [11/16] 0.0, 128
    %1024 = vxpose.xlu0.b32.cont [12/16] 0.0, 128
    %1025 = vxpose.xlu0.b32.cont [13/16] 0.0, 128
    %1026 = vxpose.xlu0.b32.cont [14/16] 0.0, 128
    %1027 = vxpose.xlu0.b32.cont [15/16] 0.0, 128
    %1028 = vxpose.xlu0.b32.end [16/16] 0.0, 128
    %v1029 = vpop.trf.xlu0
    %v1030 = vpop.trf.xlu0
    %v1031 = vpop.trf.xlu0
    %v1032 = vpop.trf.xlu0
    %v1033 = vpop.trf.xlu0
    %v1034 = vpop.trf.xlu0
    %v1035 = vpop.trf.xlu0
    %v1036 = vpop.trf.xlu0
    %v1037 = vpop.trf.xlu0
    %v1038 = vpop.trf.xlu0
    %v1039 = vpop.trf.xlu0
    %v1040 = vpop.trf.xlu0
    %v1041 = vpop.trf.xlu0
    %v1042 = vpop.trf.xlu0
    %v1043 = vpop.trf.xlu0
    %v1044 = vpop.trf.xlu0
    %1045 = vxpose.xlu0.b32.start [1/16] %v937, 128
    %1046 = vxpose.xlu0.b32.cont [2/16] 0.0, 128
    %1047 = vxpose.xlu0.b32.cont [3/16] 0.0, 128
    %1048 = vxpose.xlu0.b32.cont [4/16] 0.0, 128
    %1049 = vxpose.xlu0.b32.cont [5/16] 0.0, 128
    %1050 = vxpose.xlu0.b32.cont [6/16] 0.0, 128
    %1051 = vxpose.xlu0.b32.cont [7/16] 0.0, 128
    %1052 = vxpose.xlu0.b32.cont [8/16] 0.0, 128
    %1053 = vxpose.xlu0.b32.cont [9/16] 0.0, 128
    %1054 = vxpose.xlu0.b32.cont [10/16] 0.0, 128
    %1055 = vxpose.xlu0.b32.cont [11/16] 0.0, 128
    %1056 = vxpose.xlu0.b32.cont [12/16] 0.0, 128
    %1057 = vxpose.xlu0.b32.cont [13/16] 0.0, 128
    %1058 = vxpose.xlu0.b32.cont [14/16] 0.0, 128
    %1059 = vxpose.xlu0.b32.cont [15/16] 0.0, 128
    %1060 = vxpose.xlu0.b32.end [16/16] 0.0, 128
    %v1061 = vpop.trf.xlu0
    %v1062 = vpop.trf.xlu0
    %v1063 = vpop.trf.xlu0
    %v1064 = vpop.trf.xlu0
    %v1065 = vpop.trf.xlu0
    %v1066 = vpop.trf.xlu0
    %v1067 = vpop.trf.xlu0
    %v1068 = vpop.trf.xlu0
    %v1069 = vpop.trf.xlu0
    %v1070 = vpop.trf.xlu0
    %v1071 = vpop.trf.xlu0
    %v1072 = vpop.trf.xlu0
    %v1073 = vpop.trf.xlu0
    %v1074 = vpop.trf.xlu0
    %v1075 = vpop.trf.xlu0
    %v1076 = vpop.trf.xlu0
    %1077 = vxpose.xlu0.b32.start [1/16] %v940, 128
    %1078 = vxpose.xlu0.b32.cont [2/16] 0.0, 128
    %1079 = vxpose.xlu0.b32.cont [3/16] 0.0, 128
    %1080 = vxpose.xlu0.b32.cont [4/16] 0.0, 128
    %1081 = vxpose.xlu0.b32.cont [5/16] 0.0, 128
    %1082 = vxpose.xlu0.b32.cont [6/16] 0.0, 128
    %1083 = vxpose.xlu0.b32.cont [7/16] 0.0, 128
    %1084 = vxpose.xlu0.b32.cont [8/16] 0.0, 128
    %1085 = vxpose.xlu0.b32.cont [9/16] 0.0, 128
    %1086 = vxpose.xlu0.b32.cont [10/16] 0.0, 128
    %1087 = vxpose.xlu0.b32.cont [11/16] 0.0, 128
    %1088 = vxpose.xlu0.b32.cont [12/16] 0.0, 128
    %1089 = vxpose.xlu0.b32.cont [13/16] 0.0, 128
    %1090 = vxpose.xlu0.b32.cont [14/16] 0.0, 128
    %1091 = vxpose.xlu0.b32.cont [15/16] 0.0, 128
    %1092 = vxpose.xlu0.b32.end [16/16] 0.0, 128
    %v1093 = vpop.trf.xlu0
    %v1094 = vpop.trf.xlu0
    %v1095 = vpop.trf.xlu0
    %v1096 = vpop.trf.xlu0
    %v1097 = vpop.trf.xlu0
    %v1098 = vpop.trf.xlu0
    %v1099 = vpop.trf.xlu0
    %v1100 = vpop.trf.xlu0
    %v1101 = vpop.trf.xlu0
    %v1102 = vpop.trf.xlu0
    %v1103 = vpop.trf.xlu0
    %v1104 = vpop.trf.xlu0
    %v1105 = vpop.trf.xlu0
    %v1106 = vpop.trf.xlu0
    %v1107 = vpop.trf.xlu0
    %v1108 = vpop.trf.xlu0
    %1109 = vxpose.xlu0.b32.start [1/16] %v942, 128
    %1110 = vxpose.xlu0.b32.cont [2/16] 0.0, 128
    %1111 = vxpose.xlu0.b32.cont [3/16] 0.0, 128
    %1112 = vxpose.xlu0.b32.cont [4/16] 0.0, 128
    %1113 = vxpose.xlu0.b32.cont [5/16] 0.0, 128
    %1114 = vxpose.xlu0.b32.cont [6/16] 0.0, 128
    %1115 = vxpose.xlu0.b32.cont [7/16] 0.0, 128
    %1116 = vxpose.xlu0.b32.cont [8/16] 0.0, 128
    %1117 = vxpose.xlu0.b32.cont [9/16] 0.0, 128
    %1118 = vxpose.xlu0.b32.cont [10/16] 0.0, 128
    %1119 = vxpose.xlu0.b32.cont [11/16] 0.0, 128
    %1120 = vxpose.xlu0.b32.cont [12/16] 0.0, 128
    %1121 = vxpose.xlu0.b32.cont [13/16] 0.0, 128
    %1122 = vxpose.xlu0.b32.cont [14/16] 0.0, 128
    %1123 = vxpose.xlu0.b32.cont [15/16] 0.0, 128
    %1124 = vxpose.xlu0.b32.end [16/16] 0.0, 128
    %v1125 = vpop.trf.xlu0
    %v1126 = vpop.trf.xlu0
    %v1127 = vpop.trf.xlu0
    %v1128 = vpop.trf.xlu0
    %v1129 = vpop.trf.xlu0
    %v1130 = vpop.trf.xlu0
    %v1131 = vpop.trf.xlu0
    %v1132 = vpop.trf.xlu0
    %v1133 = vpop.trf.xlu0
    %v1134 = vpop.trf.xlu0
    %v1135 = vpop.trf.xlu0
    %v1136 = vpop.trf.xlu0
    %v1137 = vpop.trf.xlu0
    %v1138 = vpop.trf.xlu0
    %v1139 = vpop.trf.xlu0
    %v1140 = vpop.trf.xlu0
    %1141 = vxpose.xlu0.b32.start [1/16] %v945, 128
    %1142 = vxpose.xlu0.b32.cont [2/16] 0.0, 128
    %1143 = vxpose.xlu0.b32.cont [3/16] 0.0, 128
    %1144 = vxpose.xlu0.b32.cont [4/16] 0.0, 128
    %1145 = vxpose.xlu0.b32.cont [5/16] 0.0, 128
    %1146 = vxpose.xlu0.b32.cont [6/16] 0.0, 128
    %1147 = vxpose.xlu0.b32.cont [7/16] 0.0, 128
    %1148 = vxpose.xlu0.b32.cont [8/16] 0.0, 128
    %1149 = vxpose.xlu0.b32.cont [9/16] 0.0, 128
    %1150 = vxpose.xlu0.b32.cont [10/16] 0.0, 128
    %1151 = vxpose.xlu0.b32.cont [11/16] 0.0, 128
    %1152 = vxpose.xlu0.b32.cont [12/16] 0.0, 128
    %1153 = vxpose.xlu0.b32.cont [13/16] 0.0, 128
    %1154 = vxpose.xlu0.b32.cont [14/16] 0.0, 128
    %1155 = vxpose.xlu0.b32.cont [15/16] 0.0, 128
    %1156 = vxpose.xlu0.b32.end [16/16] 0.0, 128
    %v1157 = vpop.trf.xlu0
    %v1158 = vpop.trf.xlu0
    %v1159 = vpop.trf.xlu0
    %v1160 = vpop.trf.xlu0
    %v1161 = vpop.trf.xlu0
    %v1162 = vpop.trf.xlu0
    %v1163 = vpop.trf.xlu0
    %v1164 = vpop.trf.xlu0
    %v1165 = vpop.trf.xlu0
    %v1166 = vpop.trf.xlu0
    %v1167 = vpop.trf.xlu0
    %v1168 = vpop.trf.xlu0
    %v1169 = vpop.trf.xlu0
    %v1170 = vpop.trf.xlu0
    %v1171 = vpop.trf.xlu0
    %v1172 = vpop.trf.xlu0
    %1173 = vxpose.xlu0.b32.start [1/16] %v947, 128
    %1174 = vxpose.xlu0.b32.cont [2/16] 0.0, 128
    %1175 = vxpose.xlu0.b32.cont [3/16] 0.0, 128
    %1176 = vxpose.xlu0.b32.cont [4/16] 0.0, 128
    %1177 = vxpose.xlu0.b32.cont [5/16] 0.0, 128
    %1178 = vxpose.xlu0.b32.cont [6/16] 0.0, 128
    %1179 = vxpose.xlu0.b32.cont [7/16] 0.0, 128
    %1180 = vxpose.xlu0.b32.cont [8/16] 0.0, 128
    %1181 = vxpose.xlu0.b32.cont [9/16] 0.0, 128
    %1182 = vxpose.xlu0.b32.cont [10/16] 0.0, 128
    %1183 = vxpose.xlu0.b32.cont [11/16] 0.0, 128
    %1184 = vxpose.xlu0.b32.cont [12/16] 0.0, 128
    %1185 = vxpose.xlu0.b32.cont [13/16] 0.0, 128
    %1186 = vxpose.xlu0.b32.cont [14/16] 0.0, 128
    %1187 = vxpose.xlu0.b32.cont [15/16] 0.0, 128
    %1188 = vxpose.xlu0.b32.end [16/16] 0.0, 128
    %v1189 = vpop.trf.xlu0
    %v1190 = vpop.trf.xlu0
    %v1191 = vpop.trf.xlu0
    %v1192 = vpop.trf.xlu0
    %v1193 = vpop.trf.xlu0
    %v1194 = vpop.trf.xlu0
    %v1195 = vpop.trf.xlu0
    %v1196 = vpop.trf.xlu0
    %v1197 = vpop.trf.xlu0
    %v1198 = vpop.trf.xlu0
    %v1199 = vpop.trf.xlu0
    %v1200 = vpop.trf.xlu0
    %v1201 = vpop.trf.xlu0
    %v1202 = vpop.trf.xlu0
    %v1203 = vpop.trf.xlu0
    %v1204 = vpop.trf.xlu0
    %s1205 = scalar_lea.vmem [#allocation7], 8
    %v1206 = vld [vmem:[%s1205] sm:$0xf]
    %1207 = vrot.lane.b32.xlu0 %v267, 112
    %v1208 = vpop.permute.xlu0 %1207
    %1209 = vrot.lane.b32.xlu0 %v268, 112
    %v1210 = vpop.permute.xlu0 %1209
    %1211 = vrot.lane.b32.xlu0 %v269, 112
    %v1212 = vpop.permute.xlu0 %1211
    %1213 = vrot.lane.b32.xlu0 %v270, 112
    %v1214 = vpop.permute.xlu0 %1213
    %1215 = vrot.lane.b32.xlu0 %v271, 112
    %v1216 = vpop.permute.xlu0 %1215
    %1217 = vrot.lane.b32.xlu0 %v272, 112
    %v1218 = vpop.permute.xlu0 %1217
    %1219 = vrot.lane.b32.xlu0 %v273, 112
    %v1220 = vpop.permute.xlu0 %1219
    %1221 = vrot.lane.b32.xlu0 %v274, 112
    %v1222 = vpop.permute.xlu0 %1221
    %1231 = vxpose.xlu0.c.b16.start [1/8] %v1208, 128
    %1232 = vxpose.xlu0.c.b16.cont [2/8] 0, 128
    %1233 = vxpose.xlu0.c.b16.cont [3/8] 0, 128
    %1234 = vxpose.xlu0.c.b16.cont [4/8] 0, 128
    %1235 = vxpose.xlu0.c.b16.cont [5/8] 0, 128
    %1236 = vxpose.xlu0.c.b16.cont [6/8] 0, 128
    %1237 = vxpose.xlu0.c.b16.cont [7/8] 0, 128
    %1238 = vxpose.xlu0.c.b16.end [8/8] 0, 128
    %v1239 = vpop.trf.xlu0
    %v1240 = vpop.trf.xlu0
    %v1241 = vpop.trf.xlu0
    %v1242 = vpop.trf.xlu0
    %v1243 = vpop.trf.xlu0
    %v1244 = vpop.trf.xlu0
    %v1245 = vpop.trf.xlu0
    %v1246 = vpop.trf.xlu0
    %1247 = vxpose.xlu0.c.b16.start [1/8] %v1210, 128
    %1248 = vxpose.xlu0.c.b16.cont [2/8] 0, 128
    %1249 = vxpose.xlu0.c.b16.cont [3/8] 0, 128
    %1250 = vxpose.xlu0.c.b16.cont [4/8] 0, 128
    %1251 = vxpose.xlu0.c.b16.cont [5/8] 0, 128
    %1252 = vxpose.xlu0.c.b16.cont [6/8] 0, 128
    %1253 = vxpose.xlu0.c.b16.cont [7/8] 0, 128
    %1254 = vxpose.xlu0.c.b16.end [8/8] 0, 128
    %v1255 = vpop.trf.xlu0
    %v1256 = vpop.trf.xlu0
    %v1257 = vpop.trf.xlu0
    %v1258 = vpop.trf.xlu0
    %v1259 = vpop.trf.xlu0
    %v1260 = vpop.trf.xlu0
    %v1261 = vpop.trf.xlu0
    %v1262 = vpop.trf.xlu0
    %1263 = vxpose.xlu0.c.b16.start [1/8] %v1212, 128
    %1264 = vxpose.xlu0.c.b16.cont [2/8] 0, 128
    %1265 = vxpose.xlu0.c.b16.cont [3/8] 0, 128
    %1266 = vxpose.xlu0.c.b16.cont [4/8] 0, 128
    %1267 = vxpose.xlu0.c.b16.cont [5/8] 0, 128
    %1268 = vxpose.xlu0.c.b16.cont [6/8] 0, 128
    %1269 = vxpose.xlu0.c.b16.cont [7/8] 0, 128
    %1270 = vxpose.xlu0.c.b16.end [8/8] 0, 128
    %v1271 = vpop.trf.xlu0
    %v1272 = vpop.trf.xlu0
    %v1273 = vpop.trf.xlu0
    %v1274 = vpop.trf.xlu0
    %v1275 = vpop.trf.xlu0
    %v1276 = vpop.trf.xlu0
    %v1277 = vpop.trf.xlu0
    %v1278 = vpop.trf.xlu0
    %1279 = vxpose.xlu0.c.b16.start [1/8] %v1214, 128
    %1280 = vxpose.xlu0.c.b16.cont [2/8] 0, 128
    %1281 = vxpose.xlu0.c.b16.cont [3/8] 0, 128
    %1282 = vxpose.xlu0.c.b16.cont [4/8] 0, 128
    %1283 = vxpose.xlu0.c.b16.cont [5/8] 0, 128
    %1284 = vxpose.xlu0.c.b16.cont [6/8] 0, 128
    %1285 = vxpose.xlu0.c.b16.cont [7/8] 0, 128
    %1286 = vxpose.xlu0.c.b16.end [8/8] 0, 128
    %v1287 = vpop.trf.xlu0
    %v1288 = vpop.trf.xlu0
    %v1289 = vpop.trf.xlu0
    %v1290 = vpop.trf.xlu0
    %v1291 = vpop.trf.xlu0
    %v1292 = vpop.trf.xlu0
    %v1293 = vpop.trf.xlu0
    %v1294 = vpop.trf.xlu0
    %1295 = vxpose.xlu0.c.b16.start [1/8] %v1216, 128
    %1296 = vxpose.xlu0.c.b16.cont [2/8] 0, 128
    %1297 = vxpose.xlu0.c.b16.cont [3/8] 0, 128
    %1298 = vxpose.xlu0.c.b16.cont [4/8] 0, 128
    %1299 = vxpose.xlu0.c.b16.cont [5/8] 0, 128
    %1300 = vxpose.xlu0.c.b16.cont [6/8] 0, 128
    %1301 = vxpose.xlu0.c.b16.cont [7/8] 0, 128
    %1302 = vxpose.xlu0.c.b16.end [8/8] 0, 128
    %v1303 = vpop.trf.xlu0
    %v1304 = vpop.trf.xlu0
    %v1305 = vpop.trf.xlu0
    %v1306 = vpop.trf.xlu0
    %v1307 = vpop.trf.xlu0
    %v1308 = vpop.trf.xlu0
    %v1309 = vpop.trf.xlu0
    %v1310 = vpop.trf.xlu0
    %1311 = vxpose.xlu0.c.b16.start [1/8] %v1218, 128
    %1312 = vxpose.xlu0.c.b16.cont [2/8] 0, 128
    %1313 = vxpose.xlu0.c.b16.cont [3/8] 0, 128
    %1314 = vxpose.xlu0.c.b16.cont [4/8] 0, 128
    %1315 = vxpose.xlu0.c.b16.cont [5/8] 0, 128
    %1316 = vxpose.xlu0.c.b16.cont [6/8] 0, 128
    %1317 = vxpose.xlu0.c.b16.cont [7/8] 0, 128
    %1318 = vxpose.xlu0.c.b16.end [8/8] 0, 128
    %v1319 = vpop.trf.xlu0
    %v1320 = vpop.trf.xlu0
    %v1321 = vpop.trf.xlu0
    %v1322 = vpop.trf.xlu0
    %v1323 = vpop.trf.xlu0
    %v1324 = vpop.trf.xlu0
    %v1325 = vpop.trf.xlu0
    %v1326 = vpop.trf.xlu0
    %1327 = vxpose.xlu0.c.b16.start [1/8] %v1220, 128
    %1328 = vxpose.xlu0.c.b16.cont [2/8] 0, 128
    %1329 = vxpose.xlu0.c.b16.cont [3/8] 0, 128
    %1330 = vxpose.xlu0.c.b16.cont [4/8] 0, 128
    %1331 = vxpose.xlu0.c.b16.cont [5/8] 0, 128
    %1332 = vxpose.xlu0.c.b16.cont [6/8] 0, 128
    %1333 = vxpose.xlu0.c.b16.cont [7/8] 0, 128
    %1334 = vxpose.xlu0.c.b16.end [8/8] 0, 128
    %v1335 = vpop.trf.xlu0
    %v1336 = vpop.trf.xlu0
    %v1337 = vpop.trf.xlu0
    %v1338 = vpop.trf.xlu0
    %v1339 = vpop.trf.xlu0
    %v1340 = vpop.trf.xlu0
    %v1341 = vpop.trf.xlu0
    %v1342 = vpop.trf.xlu0
    %1343 = vxpose.xlu0.c.b16.start [1/8] %v1222, 128
    %1344 = vxpose.xlu0.c.b16.cont [2/8] 0, 128
    %1345 = vxpose.xlu0.c.b16.cont [3/8] 0, 128
    %1346 = vxpose.xlu0.c.b16.cont [4/8] 0, 128
    %1347 = vxpose.xlu0.c.b16.cont [5/8] 0, 128
    %1348 = vxpose.xlu0.c.b16.cont [6/8] 0, 128
    %1349 = vxpose.xlu0.c.b16.cont [7/8] 0, 128
    %1350 = vxpose.xlu0.c.b16.end [8/8] 0, 128
    %v1351 = vpop.trf.xlu0
    %v1352 = vpop.trf.xlu0
    %v1353 = vpop.trf.xlu0
    %v1354 = vpop.trf.xlu0
    %v1355 = vpop.trf.xlu0
    %v1356 = vpop.trf.xlu0
    %v1357 = vpop.trf.xlu0
    %v1358 = vpop.trf.xlu0
    %v1367 = vunpack.c.l.b16 %v1239
    %v1368 = vunpack.c.l.b16 %v1255
    %v1369 = vunpack.c.l.b16 %v1271
    %v1370 = vunpack.c.l.b16 %v1287
    %v1371 = vunpack.c.l.b16 %v1303
    %v1372 = vunpack.c.l.b16 %v1319
    %v1373 = vunpack.c.l.b16 %v1335
    %v1374 = vunpack.c.l.b16 %v1351
    %v1375 = vpack.c.b16 %v1368, %v1367
    %v1376 = vpack.c.b16 %v1370, %v1369
    %v1377 = vpack.c.b16 %v1372, %v1371
    %v1378 = vpack.c.b16 %v1374, %v1373
    %v1380 = vsel %vm144, %v1375, 0
    %v1383 = vsel %vm144, %v1376, 0
    %v1386 = vsel %vm144, %v1377, 0
    %v1389 = vsel %vm144, %v1378, 0
    %v1392 = vsel %vm144, %v1206, 0
    %1394 = vmatpush.bf16.xpose.msra.mxu0 0
    %1395 = vmatpush.bf16.xpose.msra.mxu0 0
    %1396 = vmatpush.bf16.xpose.msra.mxu0 0
    %1397 = vmatpush.bf16.xpose.msra.mxu0 0
    %1398 = vmatpush.bf16.xpose.msra.mxu0 0
    %1399 = vmatpush.bf16.xpose.msra.mxu0 0
    %1400 = vmatpush.bf16.xpose.msra.mxu0 0
    %1401 = vmatpush.bf16.xpose.msra.mxu0 %v1392
    %1402 = vmatmul.bf16.gmra.mxu0 %v1380
    %v1403 = vpop.f32.mrf.mxu0
    %v1404 = vadd.f32 0.0, %v1403
    %v1405 = vpop.f32.mrf.mxu0
    %v1406 = vadd.f32 0.0, %v1405
    %1407 = vmatmul.bf16.gmra.mxu0 %v1383
    %v1408 = vpop.f32.mrf.mxu0
    %v1409 = vadd.f32 0.0, %v1408
    %v1410 = vpop.f32.mrf.mxu0
    %v1411 = vadd.f32 0.0, %v1410
    %1412 = vmatmul.bf16.gmra.mxu0 %v1386
    %v1413 = vpop.f32.mrf.mxu0
    %v1414 = vadd.f32 0.0, %v1413
    %v1415 = vpop.f32.mrf.mxu0
    %v1416 = vadd.f32 0.0, %v1415
    %1417 = vmatmul.bf16.gmra.mxu0 %v1389
    %v1418 = vpop.f32.mrf.mxu0
    %v1419 = vadd.f32 0.0, %v1418
    %v1420 = vpop.f32.mrf.mxu0
    %v1421 = vadd.f32 0.0, %v1420
    %1422 = vdwg.mxu0
    %1423 = vxpose.xlu0.b32.start [1/16] %v1404, 128
    %1424 = vxpose.xlu0.b32.cont [2/16] 0.0, 128
    %1425 = vxpose.xlu0.b32.cont [3/16] 0.0, 128
    %1426 = vxpose.xlu0.b32.cont [4/16] 0.0, 128
    %1427 = vxpose.xlu0.b32.cont [5/16] 0.0, 128
    %1428 = vxpose.xlu0.b32.cont [6/16] 0.0, 128
    %1429 = vxpose.xlu0.b32.cont [7/16] 0.0, 128
    %1430 = vxpose.xlu0.b32.cont [8/16] 0.0, 128
    %1431 = vxpose.xlu0.b32.cont [9/16] 0.0, 128
    %1432 = vxpose.xlu0.b32.cont [10/16] 0.0, 128
    %1433 = vxpose.xlu0.b32.cont [11/16] 0.0, 128
    %1434 = vxpose.xlu0.b32.cont [12/16] 0.0, 128
    %1435 = vxpose.xlu0.b32.cont [13/16] 0.0, 128
    %1436 = vxpose.xlu0.b32.cont [14/16] 0.0, 128
    %1437 = vxpose.xlu0.b32.cont [15/16] 0.0, 128
    %1438 = vxpose.xlu0.b32.end [16/16] 0.0, 128
    %v1439 = vpop.trf.xlu0
    %v1440 = vpop.trf.xlu0
    %v1441 = vpop.trf.xlu0
    %v1442 = vpop.trf.xlu0
    %v1443 = vpop.trf.xlu0
    %v1444 = vpop.trf.xlu0
    %v1445 = vpop.trf.xlu0
    %v1446 = vpop.trf.xlu0
    %v1447 = vpop.trf.xlu0
    %v1448 = vpop.trf.xlu0
    %v1449 = vpop.trf.xlu0
    %v1450 = vpop.trf.xlu0
    %v1451 = vpop.trf.xlu0
    %v1452 = vpop.trf.xlu0
    %v1453 = vpop.trf.xlu0
    %v1454 = vpop.trf.xlu0
    %1455 = vxpose.xlu0.b32.start [1/16] %v1406, 128
    %1456 = vxpose.xlu0.b32.cont [2/16] 0.0, 128
    %1457 = vxpose.xlu0.b32.cont [3/16] 0.0, 128
    %1458 = vxpose.xlu0.b32.cont [4/16] 0.0, 128
    %1459 = vxpose.xlu0.b32.cont [5/16] 0.0, 128
    %1460 = vxpose.xlu0.b32.cont [6/16] 0.0, 128
    %1461 = vxpose.xlu0.b32.cont [7/16] 0.0, 128
    %1462 = vxpose.xlu0.b32.cont [8/16] 0.0, 128
    %1463 = vxpose.xlu0.b32.cont [9/16] 0.0, 128
    %1464 = vxpose.xlu0.b32.cont [10/16] 0.0, 128
    %1465 = vxpose.xlu0.b32.cont [11/16] 0.0, 128
    %1466 = vxpose.xlu0.b32.cont [12/16] 0.0, 128
    %1467 = vxpose.xlu0.b32.cont [13/16] 0.0, 128
    %1468 = vxpose.xlu0.b32.cont [14/16] 0.0, 128
    %1469 = vxpose.xlu0.b32.cont [15/16] 0.0, 128
    %1470 = vxpose.xlu0.b32.end [16/16] 0.0, 128
    %v1471 = vpop.trf.xlu0
    %v1472 = vpop.trf.xlu0
    %v1473 = vpop.trf.xlu0
    %v1474 = vpop.trf.xlu0
    %v1475 = vpop.trf.xlu0
    %v1476 = vpop.trf.xlu0
    %v1477 = vpop.trf.xlu0
    %v1478 = vpop.trf.xlu0
    %v1479 = vpop.trf.xlu0
    %v1480 = vpop.trf.xlu0
    %v1481 = vpop.trf.xlu0
    %v1482 = vpop.trf.xlu0
    %v1483 = vpop.trf.xlu0
    %v1484 = vpop.trf.xlu0
    %v1485 = vpop.trf.xlu0
    %v1486 = vpop.trf.xlu0
    %1487 = vxpose.xlu0.b32.start [1/16] %v1409, 128
    %1488 = vxpose.xlu0.b32.cont [2/16] 0.0, 128
    %1489 = vxpose.xlu0.b32.cont [3/16] 0.0, 128
    %1490 = vxpose.xlu0.b32.cont [4/16] 0.0, 128
    %1491 = vxpose.xlu0.b32.cont [5/16] 0.0, 128
    %1492 = vxpose.xlu0.b32.cont [6/16] 0.0, 128
    %1493 = vxpose.xlu0.b32.cont [7/16] 0.0, 128
    %1494 = vxpose.xlu0.b32.cont [8/16] 0.0, 128
    %1495 = vxpose.xlu0.b32.cont [9/16] 0.0, 128
    %1496 = vxpose.xlu0.b32.cont [10/16] 0.0, 128
    %1497 = vxpose.xlu0.b32.cont [11/16] 0.0, 128
    %1498 = vxpose.xlu0.b32.cont [12/16] 0.0, 128
    %1499 = vxpose.xlu0.b32.cont [13/16] 0.0, 128
    %1500 = vxpose.xlu0.b32.cont [14/16] 0.0, 128
    %1501 = vxpose.xlu0.b32.cont [15/16] 0.0, 128
    %1502 = vxpose.xlu0.b32.end [16/16] 0.0, 128
    %v1503 = vpop.trf.xlu0
    %v1504 = vpop.trf.xlu0
    %v1505 = vpop.trf.xlu0
    %v1506 = vpop.trf.xlu0
    %v1507 = vpop.trf.xlu0
    %v1508 = vpop.trf.xlu0
    %v1509 = vpop.trf.xlu0
    %v1510 = vpop.trf.xlu0
    %v1511 = vpop.trf.xlu0
    %v1512 = vpop.trf.xlu0
    %v1513 = vpop.trf.xlu0
    %v1514 = vpop.trf.xlu0
    %v1515 = vpop.trf.xlu0
    %v1516 = vpop.trf.xlu0
    %v1517 = vpop.trf.xlu0
    %v1518 = vpop.trf.xlu0
    %1519 = vxpose.xlu0.b32.start [1/16] %v1411, 128
    %1520 = vxpose.xlu0.b32.cont [2/16] 0.0, 128
    %1521 = vxpose.xlu0.b32.cont [3/16] 0.0, 128
    %1522 = vxpose.xlu0.b32.cont [4/16] 0.0, 128
    %1523 = vxpose.xlu0.b32.cont [5/16] 0.0, 128
    %1524 = vxpose.xlu0.b32.cont [6/16] 0.0, 128
    %1525 = vxpose.xlu0.b32.cont [7/16] 0.0, 128
    %1526 = vxpose.xlu0.b32.cont [8/16] 0.0, 128
    %1527 = vxpose.xlu0.b32.cont [9/16] 0.0, 128
    %1528 = vxpose.xlu0.b32.cont [10/16] 0.0, 128
    %1529 = vxpose.xlu0.b32.cont [11/16] 0.0, 128
    %1530 = vxpose.xlu0.b32.cont [12/16] 0.0, 128
    %1531 = vxpose.xlu0.b32.cont [13/16] 0.0, 128
    %1532 = vxpose.xlu0.b32.cont [14/16] 0.0, 128
    %1533 = vxpose.xlu0.b32.cont [15/16] 0.0, 128
    %1534 = vxpose.xlu0.b32.end [16/16] 0.0, 128
    %v1535 = vpop.trf.xlu0
    %v1536 = vpop.trf.xlu0
    %v1537 = vpop.trf.xlu0
    %v1538 = vpop.trf.xlu0
    %v1539 = vpop.trf.xlu0
    %v1540 = vpop.trf.xlu0
    %v1541 = vpop.trf.xlu0
    %v1542 = vpop.trf.xlu0
    %v1543 = vpop.trf.xlu0
    %v1544 = vpop.trf.xlu0
    %v1545 = vpop.trf.xlu0
    %v1546 = vpop.trf.xlu0
    %v1547 = vpop.trf.xlu0
    %v1548 = vpop.trf.xlu0
    %v1549 = vpop.trf.xlu0
    %v1550 = vpop.trf.xlu0
    %1551 = vxpose.xlu0.b32.start [1/16] %v1414, 128
    %1552 = vxpose.xlu0.b32.cont [2/16] 0.0, 128
    %1553 = vxpose.xlu0.b32.cont [3/16] 0.0, 128
    %1554 = vxpose.xlu0.b32.cont [4/16] 0.0, 128
    %1555 = vxpose.xlu0.b32.cont [5/16] 0.0, 128
    %1556 = vxpose.xlu0.b32.cont [6/16] 0.0, 128
    %1557 = vxpose.xlu0.b32.cont [7/16] 0.0, 128
    %1558 = vxpose.xlu0.b32.cont [8/16] 0.0, 128
    %1559 = vxpose.xlu0.b32.cont [9/16] 0.0, 128
    %1560 = vxpose.xlu0.b32.cont [10/16] 0.0, 128
    %1561 = vxpose.xlu0.b32.cont [11/16] 0.0, 128
    %1562 = vxpose.xlu0.b32.cont [12/16] 0.0, 128
    %1563 = vxpose.xlu0.b32.cont [13/16] 0.0, 128
    %1564 = vxpose.xlu0.b32.cont [14/16] 0.0, 128
    %1565 = vxpose.xlu0.b32.cont [15/16] 0.0, 128
    %1566 = vxpose.xlu0.b32.end [16/16] 0.0, 128
    %v1567 = vpop.trf.xlu0
    %v1568 = vpop.trf.xlu0
    %v1569 = vpop.trf.xlu0
    %v1570 = vpop.trf.xlu0
    %v1571 = vpop.trf.xlu0
    %v1572 = vpop.trf.xlu0
    %v1573 = vpop.trf.xlu0
    %v1574 = vpop.trf.xlu0
    %v1575 = vpop.trf.xlu0
    %v1576 = vpop.trf.xlu0
    %v1577 = vpop.trf.xlu0
    %v1578 = vpop.trf.xlu0
    %v1579 = vpop.trf.xlu0
    %v1580 = vpop.trf.xlu0
    %v1581 = vpop.trf.xlu0
    %v1582 = vpop.trf.xlu0
    %1583 = vxpose.xlu0.b32.start [1/16] %v1416, 128
    %1584 = vxpose.xlu0.b32.cont [2/16] 0.0, 128
    %1585 = vxpose.xlu0.b32.cont [3/16] 0.0, 128
    %1586 = vxpose.xlu0.b32.cont [4/16] 0.0, 128
    %1587 = vxpose.xlu0.b32.cont [5/16] 0.0, 128
    %1588 = vxpose.xlu0.b32.cont [6/16] 0.0, 128
    %1589 = vxpose.xlu0.b32.cont [7/16] 0.0, 128
    %1590 = vxpose.xlu0.b32.cont [8/16] 0.0, 128
    %1591 = vxpose.xlu0.b32.cont [9/16] 0.0, 128
    %1592 = vxpose.xlu0.b32.cont [10/16] 0.0, 128
    %1593 = vxpose.xlu0.b32.cont [11/16] 0.0, 128
    %1594 = vxpose.xlu0.b32.cont [12/16] 0.0, 128
    %1595 = vxpose.xlu0.b32.cont [13/16] 0.0, 128
    %1596 = vxpose.xlu0.b32.cont [14/16] 0.0, 128
    %1597 = vxpose.xlu0.b32.cont [15/16] 0.0, 128
    %1598 = vxpose.xlu0.b32.end [16/16] 0.0, 128
    %v1599 = vpop.trf.xlu0
    %v1600 = vpop.trf.xlu0
    %v1601 = vpop.trf.xlu0
    %v1602 = vpop.trf.xlu0
    %v1603 = vpop.trf.xlu0
    %v1604 = vpop.trf.xlu0
    %v1605 = vpop.trf.xlu0
    %v1606 = vpop.trf.xlu0
    %v1607 = vpop.trf.xlu0
    %v1608 = vpop.trf.xlu0
    %v1609 = vpop.trf.xlu0
    %v1610 = vpop.trf.xlu0
    %v1611 = vpop.trf.xlu0
    %v1612 = vpop.trf.xlu0
    %v1613 = vpop.trf.xlu0
    %v1614 = vpop.trf.xlu0
    %1615 = vxpose.xlu0.b32.start [1/16] %v1419, 128
    %1616 = vxpose.xlu0.b32.cont [2/16] 0.0, 128
    %1617 = vxpose.xlu0.b32.cont [3/16] 0.0, 128
    %1618 = vxpose.xlu0.b32.cont [4/16] 0.0, 128
    %1619 = vxpose.xlu0.b32.cont [5/16] 0.0, 128
    %1620 = vxpose.xlu0.b32.cont [6/16] 0.0, 128
    %1621 = vxpose.xlu0.b32.cont [7/16] 0.0, 128
    %1622 = vxpose.xlu0.b32.cont [8/16] 0.0, 128
    %1623 = vxpose.xlu0.b32.cont [9/16] 0.0, 128
    %1624 = vxpose.xlu0.b32.cont [10/16] 0.0, 128
    %1625 = vxpose.xlu0.b32.cont [11/16] 0.0, 128
    %1626 = vxpose.xlu0.b32.cont [12/16] 0.0, 128
    %1627 = vxpose.xlu0.b32.cont [13/16] 0.0, 128
    %1628 = vxpose.xlu0.b32.cont [14/16] 0.0, 128
    %1629 = vxpose.xlu0.b32.cont [15/16] 0.0, 128
    %1630 = vxpose.xlu0.b32.end [16/16] 0.0, 128
    %v1631 = vpop.trf.xlu0
    %v1632 = vpop.trf.xlu0
    %v1633 = vpop.trf.xlu0
    %v1634 = vpop.trf.xlu0
    %v1635 = vpop.trf.xlu0
    %v1636 = vpop.trf.xlu0
    %v1637 = vpop.trf.xlu0
    %v1638 = vpop.trf.xlu0
    %v1639 = vpop.trf.xlu0
    %v1640 = vpop.trf.xlu0
    %v1641 = vpop.trf.xlu0
    %v1642 = vpop.trf.xlu0
    %v1643 = vpop.trf.xlu0
    %v1644 = vpop.trf.xlu0
    %v1645 = vpop.trf.xlu0
    %v1646 = vpop.trf.xlu0
    %1647 = vxpose.xlu0.b32.start [1/16] %v1421, 128
    %1648 = vxpose.xlu0.b32.cont [2/16] 0.0, 128
    %1649 = vxpose.xlu0.b32.cont [3/16] 0.0, 128
    %1650 = vxpose.xlu0.b32.cont [4/16] 0.0, 128
    %1651 = vxpose.xlu0.b32.cont [5/16] 0.0, 128
    %1652 = vxpose.xlu0.b32.cont [6/16] 0.0, 128
    %1653 = vxpose.xlu0.b32.cont [7/16] 0.0, 128
    %1654 = vxpose.xlu0.b32.cont [8/16] 0.0, 128
    %1655 = vxpose.xlu0.b32.cont [9/16] 0.0, 128
    %1656 = vxpose.xlu0.b32.cont [10/16] 0.0, 128
    %1657 = vxpose.xlu0.b32.cont [11/16] 0.0, 128
    %1658 = vxpose.xlu0.b32.cont [12/16] 0.0, 128
    %1659 = vxpose.xlu0.b32.cont [13/16] 0.0, 128
    %1660 = vxpose.xlu0.b32.cont [14/16] 0.0, 128
    %1661 = vxpose.xlu0.b32.cont [15/16] 0.0, 128
    %1662 = vxpose.xlu0.b32.end [16/16] 0.0, 128
    %v1663 = vpop.trf.xlu0
    %v1664 = vpop.trf.xlu0
    %v1665 = vpop.trf.xlu0
    %v1666 = vpop.trf.xlu0
    %v1667 = vpop.trf.xlu0
    %v1668 = vpop.trf.xlu0
    %v1669 = vpop.trf.xlu0
    %v1670 = vpop.trf.xlu0
    %v1671 = vpop.trf.xlu0
    %v1672 = vpop.trf.xlu0
    %v1673 = vpop.trf.xlu0
    %v1674 = vpop.trf.xlu0
    %v1675 = vpop.trf.xlu0
    %v1676 = vpop.trf.xlu0
    %v1677 = vpop.trf.xlu0
    %v1678 = vpop.trf.xlu0
    %s1679 = scalar_lea.vmem [#allocation7], 12
    %v1680 = vld [vmem:[%s1679] sm:$0xf]
    %1681 = vrot.lane.b32.xlu0 %v267, 104
    %v1682 = vpop.permute.xlu0 %1681
    %1683 = vrot.lane.b32.xlu0 %v268, 104
    %v1684 = vpop.permute.xlu0 %1683
    %1685 = vrot.lane.b32.xlu0 %v269, 104
    %v1686 = vpop.permute.xlu0 %1685
    %1687 = vrot.lane.b32.xlu0 %v270, 104
    %v1688 = vpop.permute.xlu0 %1687
    %1689 = vrot.lane.b32.xlu0 %v271, 104
    %v1690 = vpop.permute.xlu0 %1689
    %1691 = vrot.lane.b32.xlu0 %v272, 104
    %v1692 = vpop.permute.xlu0 %1691
    %1693 = vrot.lane.b32.xlu0 %v273, 104
    %v1694 = vpop.permute.xlu0 %1693
    %1695 = vrot.lane.b32.xlu0 %v274, 104
    %v1696 = vpop.permute.xlu0 %1695
    %1705 = vxpose.xlu0.c.b16.start [1/8] %v1682, 128
    %1706 = vxpose.xlu0.c.b16.cont [2/8] 0, 128
    %1707 = vxpose.xlu0.c.b16.cont [3/8] 0, 128
    %1708 = vxpose.xlu0.c.b16.cont [4/8] 0, 128
    %1709 = vxpose.xlu0.c.b16.cont [5/8] 0, 128
    %1710 = vxpose.xlu0.c.b16.cont [6/8] 0, 128
    %1711 = vxpose.xlu0.c.b16.cont [7/8] 0, 128
    %1712 = vxpose.xlu0.c.b16.end [8/8] 0, 128
    %v1713 = vpop.trf.xlu0
    %v1714 = vpop.trf.xlu0
    %v1715 = vpop.trf.xlu0
    %v1716 = vpop.trf.xlu0
    %v1717 = vpop.trf.xlu0
    %v1718 = vpop.trf.xlu0
    %v1719 = vpop.trf.xlu0
    %v1720 = vpop.trf.xlu0
    %1721 = vxpose.xlu0.c.b16.start [1/8] %v1684, 128
    %1722 = vxpose.xlu0.c.b16.cont [2/8] 0, 128
    %1723 = vxpose.xlu0.c.b16.cont [3/8] 0, 128
    %1724 = vxpose.xlu0.c.b16.cont [4/8] 0, 128
    %1725 = vxpose.xlu0.c.b16.cont [5/8] 0, 128
    %1726 = vxpose.xlu0.c.b16.cont [6/8] 0, 128
    %1727 = vxpose.xlu0.c.b16.cont [7/8] 0, 128
    %1728 = vxpose.xlu0.c.b16.end [8/8] 0, 128
    %v1729 = vpop.trf.xlu0
    %v1730 = vpop.trf.xlu0
    %v1731 = vpop.trf.xlu0
    %v1732 = vpop.trf.xlu0
    %v1733 = vpop.trf.xlu0
    %v1734 = vpop.trf.xlu0
    %v1735 = vpop.trf.xlu0
    %v1736 = vpop.trf.xlu0
    %1737 = vxpose.xlu0.c.b16.start [1/8] %v1686, 128
    %1738 = vxpose.xlu0.c.b16.cont [2/8] 0, 128
    %1739 = vxpose.xlu0.c.b16.cont [3/8] 0, 128
    %1740 = vxpose.xlu0.c.b16.cont [4/8] 0, 128
    %1741 = vxpose.xlu0.c.b16.cont [5/8] 0, 128
    %1742 = vxpose.xlu0.c.b16.cont [6/8] 0, 128
    %1743 = vxpose.xlu0.c.b16.cont [7/8] 0, 128
    %1744 = vxpose.xlu0.c.b16.end [8/8] 0, 128
    %v1745 = vpop.trf.xlu0
    %v1746 = vpop.trf.xlu0
    %v1747 = vpop.trf.xlu0
    %v1748 = vpop.trf.xlu0
    %v1749 = vpop.trf.xlu0
    %v1750 = vpop.trf.xlu0
    %v1751 = vpop.trf.xlu0
    %v1752 = vpop.trf.xlu0
    %1753 = vxpose.xlu0.c.b16.start [1/8] %v1688, 128
    %1754 = vxpose.xlu0.c.b16.cont [2/8] 0, 128
    %1755 = vxpose.xlu0.c.b16.cont [3/8] 0, 128
    %1756 = vxpose.xlu0.c.b16.cont [4/8] 0, 128
    %1757 = vxpose.xlu0.c.b16.cont [5/8] 0, 128
    %1758 = vxpose.xlu0.c.b16.cont [6/8] 0, 128
    %1759 = vxpose.xlu0.c.b16.cont [7/8] 0, 128
    %1760 = vxpose.xlu0.c.b16.end [8/8] 0, 128
    %v1761 = vpop.trf.xlu0
    %v1762 = vpop.trf.xlu0
    %v1763 = vpop.trf.xlu0
    %v1764 = vpop.trf.xlu0
    %v1765 = vpop.trf.xlu0
    %v1766 = vpop.trf.xlu0
    %v1767 = vpop.trf.xlu0
    %v1768 = vpop.trf.xlu0
    %1769 = vxpose.xlu0.c.b16.start [1/8] %v1690, 128
    %1770 = vxpose.xlu0.c.b16.cont [2/8] 0, 128
    %1771 = vxpose.xlu0.c.b16.cont [3/8] 0, 128
    %1772 = vxpose.xlu0.c.b16.cont [4/8] 0, 128
    %1773 = vxpose.xlu0.c.b16.cont [5/8] 0, 128
    %1774 = vxpose.xlu0.c.b16.cont [6/8] 0, 128
    %1775 = vxpose.xlu0.c.b16.cont [7/8] 0, 128
    %1776 = vxpose.xlu0.c.b16.end [8/8] 0, 128
    %v1777 = vpop.trf.xlu0
    %v1778 = vpop.trf.xlu0
    %v1779 = vpop.trf.xlu0
    %v1780 = vpop.trf.xlu0
    %v1781 = vpop.trf.xlu0
    %v1782 = vpop.trf.xlu0
    %v1783 = vpop.trf.xlu0
    %v1784 = vpop.trf.xlu0
    %1785 = vxpose.xlu0.c.b16.start [1/8] %v1692, 128
    %1786 = vxpose.xlu0.c.b16.cont [2/8] 0, 128
    %1787 = vxpose.xlu0.c.b16.cont [3/8] 0, 128
    %1788 = vxpose.xlu0.c.b16.cont [4/8] 0, 128
    %1789 = vxpose.xlu0.c.b16.cont [5/8] 0, 128
    %1790 = vxpose.xlu0.c.b16.cont [6/8] 0, 128
    %1791 = vxpose.xlu0.c.b16.cont [7/8] 0, 128
    %1792 = vxpose.xlu0.c.b16.end [8/8] 0, 128
    %v1793 = vpop.trf.xlu0
    %v1794 = vpop.trf.xlu0
    %v1795 = vpop.trf.xlu0
    %v1796 = vpop.trf.xlu0
    %v1797 = vpop.trf.xlu0
    %v1798 = vpop.trf.xlu0
    %v1799 = vpop.trf.xlu0
    %v1800 = vpop.trf.xlu0
    %1801 = vxpose.xlu0.c.b16.start [1/8] %v1694, 128
    %1802 = vxpose.xlu0.c.b16.cont [2/8] 0, 128
    %1803 = vxpose.xlu0.c.b16.cont [3/8] 0, 128
    %1804 = vxpose.xlu0.c.b16.cont [4/8] 0, 128
    %1805 = vxpose.xlu0.c.b16.cont [5/8] 0, 128
    %1806 = vxpose.xlu0.c.b16.cont [6/8] 0, 128
    %1807 = vxpose.xlu0.c.b16.cont [7/8] 0, 128
    %1808 = vxpose.xlu0.c.b16.end [8/8] 0, 128
    %v1809 = vpop.trf.xlu0
    %v1810 = vpop.trf.xlu0
    %v1811 = vpop.trf.xlu0
    %v1812 = vpop.trf.xlu0
    %v1813 = vpop.trf.xlu0
    %v1814 = vpop.trf.xlu0
    %v1815 = vpop.trf.xlu0
    %v1816 = vpop.trf.xlu0
    %1817 = vxpose.xlu0.c.b16.start [1/8] %v1696, 128
    %1818 = vxpose.xlu0.c.b16.cont [2/8] 0, 128
    %1819 = vxpose.xlu0.c.b16.cont [3/8] 0, 128
    %1820 = vxpose.xlu0.c.b16.cont [4/8] 0, 128
    %1821 = vxpose.xlu0.c.b16.cont [5/8] 0, 128
    %1822 = vxpose.xlu0.c.b16.cont [6/8] 0, 128
    %1823 = vxpose.xlu0.c.b16.cont [7/8] 0, 128
    %1824 = vxpose.xlu0.c.b16.end [8/8] 0, 128
    %v1825 = vpop.trf.xlu0
    %v1826 = vpop.trf.xlu0
    %v1827 = vpop.trf.xlu0
    %v1828 = vpop.trf.xlu0
    %v1829 = vpop.trf.xlu0
    %v1830 = vpop.trf.xlu0
    %v1831 = vpop.trf.xlu0
    %v1832 = vpop.trf.xlu0
    %v1841 = vunpack.c.l.b16 %v1713
    %v1842 = vunpack.c.l.b16 %v1729
    %v1843 = vunpack.c.l.b16 %v1745
    %v1844 = vunpack.c.l.b16 %v1761
    %v1845 = vunpack.c.l.b16 %v1777
    %v1846 = vunpack.c.l.b16 %v1793
    %v1847 = vunpack.c.l.b16 %v1809
    %v1848 = vunpack.c.l.b16 %v1825
    %v1849 = vpack.c.b16 %v1842, %v1841
    %v1850 = vpack.c.b16 %v1844, %v1843
    %v1851 = vpack.c.b16 %v1846, %v1845
    %v1852 = vpack.c.b16 %v1848, %v1847
    %v1854 = vsel %vm144, %v1849, 0
    %v1857 = vsel %vm144, %v1850, 0
    %v1860 = vsel %vm144, %v1851, 0
    %v1863 = vsel %vm144, %v1852, 0
    %v1866 = vsel %vm144, %v1680, 0
    %1868 = vmatpush.bf16.xpose.msra.mxu0 0
    %1869 = vmatpush.bf16.xpose.msra.mxu0 0
    %1870 = vmatpush.bf16.xpose.msra.mxu0 0
    %1871 = vmatpush.bf16.xpose.msra.mxu0 0
    %1872 = vmatpush.bf16.xpose.msra.mxu0 0
    %1873 = vmatpush.bf16.xpose.msra.mxu0 0
    %1874 = vmatpush.bf16.xpose.msra.mxu0 0
    %1875 = vmatpush.bf16.xpose.msra.mxu0 %v1866
    %1876 = vmatmul.bf16.gmra.mxu0 %v1854
    %v1877 = vpop.f32.mrf.mxu0
    %v1878 = vadd.f32 0.0, %v1877
    %v1879 = vpop.f32.mrf.mxu0
    %v1880 = vadd.f32 0.0, %v1879
    %1881 = vmatmul.bf16.gmra.mxu0 %v1857
    %v1882 = vpop.f32.mrf.mxu0
    %v1883 = vadd.f32 0.0, %v1882
    %v1884 = vpop.f32.mrf.mxu0
    %v1885 = vadd.f32 0.0, %v1884
    %1886 = vmatmul.bf16.gmra.mxu0 %v1860
    %v1887 = vpop.f32.mrf.mxu0
    %v1888 = vadd.f32 0.0, %v1887
    %v1889 = vpop.f32.mrf.mxu0
    %v1890 = vadd.f32 0.0, %v1889
    %1891 = vmatmul.bf16.gmra.mxu0 %v1863
    %v1892 = vpop.f32.mrf.mxu0
    %v1893 = vadd.f32 0.0, %v1892
    %v1894 = vpop.f32.mrf.mxu0
    %v1895 = vadd.f32 0.0, %v1894
    %1896 = vdwg.mxu0
    %1897 = vxpose.xlu0.b32.start [1/16] %v1878, 128
    %1898 = vxpose.xlu0.b32.cont [2/16] 0.0, 128
    %1899 = vxpose.xlu0.b32.cont [3/16] 0.0, 128
    %1900 = vxpose.xlu0.b32.cont [4/16] 0.0, 128
    %1901 = vxpose.xlu0.b32.cont [5/16] 0.0, 128
    %1902 = vxpose.xlu0.b32.cont [6/16] 0.0, 128
    %1903 = vxpose.xlu0.b32.cont [7/16] 0.0, 128
    %1904 = vxpose.xlu0.b32.cont [8/16] 0.0, 128
    %1905 = vxpose.xlu0.b32.cont [9/16] 0.0, 128
    %1906 = vxpose.xlu0.b32.cont [10/16] 0.0, 128
    %1907 = vxpose.xlu0.b32.cont [11/16] 0.0, 128
    %1908 = vxpose.xlu0.b32.cont [12/16] 0.0, 128
    %1909 = vxpose.xlu0.b32.cont [13/16] 0.0, 128
    %1910 = vxpose.xlu0.b32.cont [14/16] 0.0, 128
    %1911 = vxpose.xlu0.b32.cont [15/16] 0.0, 128
    %1912 = vxpose.xlu0.b32.end [16/16] 0.0, 128
    %v1913 = vpop.trf.xlu0
    %v1914 = vpop.trf.xlu0
    %v1915 = vpop.trf.xlu0
    %v1916 = vpop.trf.xlu0
    %v1917 = vpop.trf.xlu0
    %v1918 = vpop.trf.xlu0
    %v1919 = vpop.trf.xlu0
    %v1920 = vpop.trf.xlu0
    %v1921 = vpop.trf.xlu0
    %v1922 = vpop.trf.xlu0
    %v1923 = vpop.trf.xlu0
    %v1924 = vpop.trf.xlu0
    %v1925 = vpop.trf.xlu0
    %v1926 = vpop.trf.xlu0
    %v1927 = vpop.trf.xlu0
    %v1928 = vpop.trf.xlu0
    %1929 = vxpose.xlu0.b32.start [1/16] %v1880, 128
    %1930 = vxpose.xlu0.b32.cont [2/16] 0.0, 128
    %1931 = vxpose.xlu0.b32.cont [3/16] 0.0, 128
    %1932 = vxpose.xlu0.b32.cont [4/16] 0.0, 128
    %1933 = vxpose.xlu0.b32.cont [5/16] 0.0, 128
    %1934 = vxpose.xlu0.b32.cont [6/16] 0.0, 128
    %1935 = vxpose.xlu0.b32.cont [7/16] 0.0, 128
    %1936 = vxpose.xlu0.b32.cont [8/16] 0.0, 128
    %1937 = vxpose.xlu0.b32.cont [9/16] 0.0, 128
    %1938 = vxpose.xlu0.b32.cont [10/16] 0.0, 128
    %1939 = vxpose.xlu0.b32.cont [11/16] 0.0, 128
    %1940 = vxpose.xlu0.b32.cont [12/16] 0.0, 128
    %1941 = vxpose.xlu0.b32.cont [13/16] 0.0, 128
    %1942 = vxpose.xlu0.b32.cont [14/16] 0.0, 128
    %1943 = vxpose.xlu0.b32.cont [15/16] 0.0, 128
    %1944 = vxpose.xlu0.b32.end [16/16] 0.0, 128
    %v1945 = vpop.trf.xlu0
    %v1946 = vpop.trf.xlu0
    %v1947 = vpop.trf.xlu0
    %v1948 = vpop.trf.xlu0
    %v1949 = vpop.trf.xlu0
    %v1950 = vpop.trf.xlu0
    %v1951 = vpop.trf.xlu0
    %v1952 = vpop.trf.xlu0
    %v1953 = vpop.trf.xlu0
    %v1954 = vpop.trf.xlu0
    %v1955 = vpop.trf.xlu0
    %v1956 = vpop.trf.xlu0
    %v1957 = vpop.trf.xlu0
    %v1958 = vpop.trf.xlu0
    %v1959 = vpop.trf.xlu0
    %v1960 = vpop.trf.xlu0
    %1961 = vxpose.xlu0.b32.start [1/16] %v1883, 128
    %1962 = vxpose.xlu0.b32.cont [2/16] 0.0, 128
    %1963 = vxpose.xlu0.b32.cont [3/16] 0.0, 128
    %1964 = vxpose.xlu0.b32.cont [4/16] 0.0, 128
    %1965 = vxpose.xlu0.b32.cont [5/16] 0.0, 128
    %1966 = vxpose.xlu0.b32.cont [6/16] 0.0, 128
    %1967 = vxpose.xlu0.b32.cont [7/16] 0.0, 128
    %1968 = vxpose.xlu0.b32.cont [8/16] 0.0, 128
    %1969 = vxpose.xlu0.b32.cont [9/16] 0.0, 128
    %1970 = vxpose.xlu0.b32.cont [10/16] 0.0, 128
    %1971 = vxpose.xlu0.b32.cont [11/16] 0.0, 128
    %1972 = vxpose.xlu0.b32.cont [12/16] 0.0, 128
    %1973 = vxpose.xlu0.b32.cont [13/16] 0.0, 128
    %1974 = vxpose.xlu0.b32.cont [14/16] 0.0, 128
    %1975 = vxpose.xlu0.b32.cont [15/16] 0.0, 128
    %1976 = vxpose.xlu0.b32.end [16/16] 0.0, 128
    %v1977 = vpop.trf.xlu0
    %v1978 = vpop.trf.xlu0
    %v1979 = vpop.trf.xlu0
    %v1980 = vpop.trf.xlu0
    %v1981 = vpop.trf.xlu0
    %v1982 = vpop.trf.xlu0
    %v1983 = vpop.trf.xlu0
    %v1984 = vpop.trf.xlu0
    %v1985 = vpop.trf.xlu0
    %v1986 = vpop.trf.xlu0
    %v1987 = vpop.trf.xlu0
    %v1988 = vpop.trf.xlu0
    %v1989 = vpop.trf.xlu0
    %v1990 = vpop.trf.xlu0
    %v1991 = vpop.trf.xlu0
    %v1992 = vpop.trf.xlu0
    %1993 = vxpose.xlu0.b32.start [1/16] %v1885, 128
    %1994 = vxpose.xlu0.b32.cont [2/16] 0.0, 128
    %1995 = vxpose.xlu0.b32.cont [3/16] 0.0, 128
    %1996 = vxpose.xlu0.b32.cont [4/16] 0.0, 128
    %1997 = vxpose.xlu0.b32.cont [5/16] 0.0, 128
    %1998 = vxpose.xlu0.b32.cont [6/16] 0.0, 128
    %1999 = vxpose.xlu0.b32.cont [7/16] 0.0, 128
    %2000 = vxpose.xlu0.b32.cont [8/16] 0.0, 128
    %2001 = vxpose.xlu0.b32.cont [9/16] 0.0, 128
    %2002 = vxpose.xlu0.b32.cont [10/16] 0.0, 128
    %2003 = vxpose.xlu0.b32.cont [11/16] 0.0, 128
    %2004 = vxpose.xlu0.b32.cont [12/16] 0.0, 128
    %2005 = vxpose.xlu0.b32.cont [13/16] 0.0, 128
    %2006 = vxpose.xlu0.b32.cont [14/16] 0.0, 128
    %2007 = vxpose.xlu0.b32.cont [15/16] 0.0, 128
    %2008 = vxpose.xlu0.b32.end [16/16] 0.0, 128
    %v2009 = vpop.trf.xlu0
    %v2010 = vpop.trf.xlu0
    %v2011 = vpop.trf.xlu0
    %v2012 = vpop.trf.xlu0
    %v2013 = vpop.trf.xlu0
    %v2014 = vpop.trf.xlu0
    %v2015 = vpop.trf.xlu0
    %v2016 = vpop.trf.xlu0
    %v2017 = vpop.trf.xlu0
    %v2018 = vpop.trf.xlu0
    %v2019 = vpop.trf.xlu0
    %v2020 = vpop.trf.xlu0
    %v2021 = vpop.trf.xlu0
    %v2022 = vpop.trf.xlu0
    %v2023 = vpop.trf.xlu0
    %v2024 = vpop.trf.xlu0
    %2025 = vxpose.xlu0.b32.start [1/16] %v1888, 128
    %2026 = vxpose.xlu0.b32.cont [2/16] 0.0, 128
    %2027 = vxpose.xlu0.b32.cont [3/16] 0.0, 128
    %2028 = vxpose.xlu0.b32.cont [4/16] 0.0, 128
    %2029 = vxpose.xlu0.b32.cont [5/16] 0.0, 128
    %2030 = vxpose.xlu0.b32.cont [6/16] 0.0, 128
    %2031 = vxpose.xlu0.b32.cont [7/16] 0.0, 128
    %2032 = vxpose.xlu0.b32.cont [8/16] 0.0, 128
    %2033 = vxpose.xlu0.b32.cont [9/16] 0.0, 128
    %2034 = vxpose.xlu0.b32.cont [10/16] 0.0, 128
    %2035 = vxpose.xlu0.b32.cont [11/16] 0.0, 128
    %2036 = vxpose.xlu0.b32.cont [12/16] 0.0, 128
    %2037 = vxpose.xlu0.b32.cont [13/16] 0.0, 128
    %2038 = vxpose.xlu0.b32.cont [14/16] 0.0, 128
    %2039 = vxpose.xlu0.b32.cont [15/16] 0.0, 128
    %2040 = vxpose.xlu0.b32.end [16/16] 0.0, 128
    %v2041 = vpop.trf.xlu0
    %v2042 = vpop.trf.xlu0
    %v2043 = vpop.trf.xlu0
    %v2044 = vpop.trf.xlu0
    %v2045 = vpop.trf.xlu0
    %v2046 = vpop.trf.xlu0
    %v2047 = vpop.trf.xlu0
    %v2048 = vpop.trf.xlu0
    %v2049 = vpop.trf.xlu0
    %v2050 = vpop.trf.xlu0
    %v2051 = vpop.trf.xlu0
    %v2052 = vpop.trf.xlu0
    %v2053 = vpop.trf.xlu0
    %v2054 = vpop.trf.xlu0
    %v2055 = vpop.trf.xlu0
    %v2056 = vpop.trf.xlu0
    %2057 = vxpose.xlu0.b32.start [1/16] %v1890, 128
    %2058 = vxpose.xlu0.b32.cont [2/16] 0.0, 128
    %2059 = vxpose.xlu0.b32.cont [3/16] 0.0, 128
    %2060 = vxpose.xlu0.b32.cont [4/16] 0.0, 128
    %2061 = vxpose.xlu0.b32.cont [5/16] 0.0, 128
    %2062 = vxpose.xlu0.b32.cont [6/16] 0.0, 128
    %2063 = vxpose.xlu0.b32.cont [7/16] 0.0, 128
    %2064 = vxpose.xlu0.b32.cont [8/16] 0.0, 128
    %2065 = vxpose.xlu0.b32.cont [9/16] 0.0, 128
    %2066 = vxpose.xlu0.b32.cont [10/16] 0.0, 128
    %2067 = vxpose.xlu0.b32.cont [11/16] 0.0, 128
    %2068 = vxpose.xlu0.b32.cont [12/16] 0.0, 128
    %2069 = vxpose.xlu0.b32.cont [13/16] 0.0, 128
    %2070 = vxpose.xlu0.b32.cont [14/16] 0.0, 128
    %2071 = vxpose.xlu0.b32.cont [15/16] 0.0, 128
    %2072 = vxpose.xlu0.b32.end [16/16] 0.0, 128
    %v2073 = vpop.trf.xlu0
    %v2074 = vpop.trf.xlu0
    %v2075 = vpop.trf.xlu0
    %v2076 = vpop.trf.xlu0
    %v2077 = vpop.trf.xlu0
    %v2078 = vpop.trf.xlu0
    %v2079 = vpop.trf.xlu0
    %v2080 = vpop.trf.xlu0
    %v2081 = vpop.trf.xlu0
    %v2082 = vpop.trf.xlu0
    %v2083 = vpop.trf.xlu0
    %v2084 = vpop.trf.xlu0
    %v2085 = vpop.trf.xlu0
    %v2086 = vpop.trf.xlu0
    %v2087 = vpop.trf.xlu0
    %v2088 = vpop.trf.xlu0
    %2089 = vxpose.xlu0.b32.start [1/16] %v1893, 128
    %2090 = vxpose.xlu0.b32.cont [2/16] 0.0, 128
    %2091 = vxpose.xlu0.b32.cont [3/16] 0.0, 128
    %2092 = vxpose.xlu0.b32.cont [4/16] 0.0, 128
    %2093 = vxpose.xlu0.b32.cont [5/16] 0.0, 128
    %2094 = vxpose.xlu0.b32.cont [6/16] 0.0, 128
    %2095 = vxpose.xlu0.b32.cont [7/16] 0.0, 128
    %2096 = vxpose.xlu0.b32.cont [8/16] 0.0, 128
    %2097 = vxpose.xlu0.b32.cont [9/16] 0.0, 128
    %2098 = vxpose.xlu0.b32.cont [10/16] 0.0, 128
    %2099 = vxpose.xlu0.b32.cont [11/16] 0.0, 128
    %2100 = vxpose.xlu0.b32.cont [12/16] 0.0, 128
    %2101 = vxpose.xlu0.b32.cont [13/16] 0.0, 128
    %2102 = vxpose.xlu0.b32.cont [14/16] 0.0, 128
    %2103 = vxpose.xlu0.b32.cont [15/16] 0.0, 128
    %2104 = vxpose.xlu0.b32.end [16/16] 0.0, 128
    %v2105 = vpop.trf.xlu0
    %v2106 = vpop.trf.xlu0
    %v2107 = vpop.trf.xlu0
    %v2108 = vpop.trf.xlu0
    %v2109 = vpop.trf.xlu0
    %v2110 = vpop.trf.xlu0
    %v2111 = vpop.trf.xlu0
    %v2112 = vpop.trf.xlu0
    %v2113 = vpop.trf.xlu0
    %v2114 = vpop.trf.xlu0
    %v2115 = vpop.trf.xlu0
    %v2116 = vpop.trf.xlu0
    %v2117 = vpop.trf.xlu0
    %v2118 = vpop.trf.xlu0
    %v2119 = vpop.trf.xlu0
    %v2120 = vpop.trf.xlu0
    %2121 = vxpose.xlu0.b32.start [1/16] %v1895, 128
    %2122 = vxpose.xlu0.b32.cont [2/16] 0.0, 128
    %2123 = vxpose.xlu0.b32.cont [3/16] 0.0, 128
    %2124 = vxpose.xlu0.b32.cont [4/16] 0.0, 128
    %2125 = vxpose.xlu0.b32.cont [5/16] 0.0, 128
    %2126 = vxpose.xlu0.b32.cont [6/16] 0.0, 128
    %2127 = vxpose.xlu0.b32.cont [7/16] 0.0, 128
    %2128 = vxpose.xlu0.b32.cont [8/16] 0.0, 128
    %2129 = vxpose.xlu0.b32.cont [9/16] 0.0, 128
    %2130 = vxpose.xlu0.b32.cont [10/16] 0.0, 128
    %2131 = vxpose.xlu0.b32.cont [11/16] 0.0, 128
    %2132 = vxpose.xlu0.b32.cont [12/16] 0.0, 128
    %2133 = vxpose.xlu0.b32.cont [13/16] 0.0, 128
    %2134 = vxpose.xlu0.b32.cont [14/16] 0.0, 128
    %2135 = vxpose.xlu0.b32.cont [15/16] 0.0, 128
    %2136 = vxpose.xlu0.b32.end [16/16] 0.0, 128
    %v2137 = vpop.trf.xlu0
    %v2138 = vpop.trf.xlu0
    %v2139 = vpop.trf.xlu0
    %v2140 = vpop.trf.xlu0
    %v2141 = vpop.trf.xlu0
    %v2142 = vpop.trf.xlu0
    %v2143 = vpop.trf.xlu0
    %v2144 = vpop.trf.xlu0
    %v2145 = vpop.trf.xlu0
    %v2146 = vpop.trf.xlu0
    %v2147 = vpop.trf.xlu0
    %v2148 = vpop.trf.xlu0
    %v2149 = vpop.trf.xlu0
    %v2150 = vpop.trf.xlu0
    %v2151 = vpop.trf.xlu0
    %v2152 = vpop.trf.xlu0
    %2161 = vrot.lane.b32.xlu0 %v965, 8
    %v2162 = vpop.permute.xlu0 %2161
    %2163 = vrot.lane.b32.xlu0 %v997, 8
    %v2164 = vpop.permute.xlu0 %2163
    %2165 = vrot.lane.b32.xlu0 %v1029, 8
    %v2166 = vpop.permute.xlu0 %2165
    %2167 = vrot.lane.b32.xlu0 %v1061, 8
    %v2168 = vpop.permute.xlu0 %2167
    %2169 = vrot.lane.b32.xlu0 %v1093, 8
    %v2170 = vpop.permute.xlu0 %2169
    %2171 = vrot.lane.b32.xlu0 %v1125, 8
    %v2172 = vpop.permute.xlu0 %2171
    %2173 = vrot.lane.b32.xlu0 %v1157, 8
    %v2174 = vpop.permute.xlu0 %2173
    %2175 = vrot.lane.b32.xlu0 %v1189, 8
    %v2176 = vpop.permute.xlu0 %2175
    %2193 = vrot.lane.b32.xlu0 %v1439, 16
    %v2194 = vpop.permute.xlu0 %2193
    %2195 = vrot.lane.b32.xlu0 %v1471, 16
    %v2196 = vpop.permute.xlu0 %2195
    %2197 = vrot.lane.b32.xlu0 %v1503, 16
    %v2198 = vpop.permute.xlu0 %2197
    %2199 = vrot.lane.b32.xlu0 %v1535, 16
    %v2200 = vpop.permute.xlu0 %2199
    %2201 = vrot.lane.b32.xlu0 %v1567, 16
    %v2202 = vpop.permute.xlu0 %2201
    %2203 = vrot.lane.b32.xlu0 %v1599, 16
    %v2204 = vpop.permute.xlu0 %2203
    %2205 = vrot.lane.b32.xlu0 %v1631, 16
    %v2206 = vpop.permute.xlu0 %2205
    %2207 = vrot.lane.b32.xlu0 %v1663, 16
    %v2208 = vpop.permute.xlu0 %2207
    %2225 = vrot.lane.b32.xlu0 %v1913, 24
    %v2226 = vpop.permute.xlu0 %2225
    %2227 = vrot.lane.b32.xlu0 %v1945, 24
    %v2228 = vpop.permute.xlu0 %2227
    %2229 = vrot.lane.b32.xlu0 %v1977, 24
    %v2230 = vpop.permute.xlu0 %2229
    %2231 = vrot.lane.b32.xlu0 %v2009, 24
    %v2232 = vpop.permute.xlu0 %2231
    %2233 = vrot.lane.b32.xlu0 %v2041, 24
    %v2234 = vpop.permute.xlu0 %2233
    %2235 = vrot.lane.b32.xlu0 %v2073, 24
    %v2236 = vpop.permute.xlu0 %2235
    %2237 = vrot.lane.b32.xlu0 %v2105, 24
    %v2238 = vpop.permute.xlu0 %2237
    %2239 = vrot.lane.b32.xlu0 %v2137, 24
    %v2240 = vpop.permute.xlu0 %2239
    %vm2249 = vcmask 64512
    %v2250 = vsel %vm2249, %v491, %v2162
    %v2251 = vsel %vm2249, %v523, %v2164
    %v2252 = vsel %vm2249, %v555, %v2166
    %v2253 = vsel %vm2249, %v587, %v2168
    %v2254 = vsel %vm2249, %v619, %v2170
    %v2255 = vsel %vm2249, %v651, %v2172
    %v2256 = vsel %vm2249, %v683, %v2174
    %v2257 = vsel %vm2249, %v715, %v2176
    %v2258 = vsel %vm144, %v2250, %v2194
    %v2259 = vsel %vm144, %v2251, %v2196
    %v2260 = vsel %vm144, %v2252, %v2198
    %v2261 = vsel %vm144, %v2253, %v2200
    %v2262 = vsel %vm144, %v2254, %v2202
    %v2263 = vsel %vm144, %v2255, %v2204
    %v2264 = vsel %vm144, %v2256, %v2206
    %v2265 = vsel %vm144, %v2257, %v2208
    %vm2266 = vcmask 195584
    %v2267 = vsel %vm2266, %v2258, %v2226
    %v2268 = vsel %vm2266, %v2259, %v2228
    %v2269 = vsel %vm2266, %v2260, %v2230
    %v2270 = vsel %vm2266, %v2261, %v2232
    %v2271 = vsel %vm2266, %v2262, %v2234
    %v2272 = vsel %vm2266, %v2263, %v2236
    %v2273 = vsel %vm2266, %v2264, %v2238
    %v2274 = vsel %vm2266, %v2265, %v2240
    %v2275 = vld [vmem:[#allocation8] sm:$0xff]
    %v2276 = vmul.f32 %v2267, %v2275
    %v2277 = vmul.f32 %v2268, %v2275
    %v2278 = vmul.f32 %v2269, %v2275
    %v2279 = vmul.f32 %v2270, %v2275
    %v2280 = vmul.f32 %v2271, %v2275
    %v2281 = vmul.f32 %v2272, %v2275
    %v2282 = vmul.f32 %v2273, %v2275
    %v2283 = vmul.f32 %v2274, %v2275
    %vm2284 = vcmask 261120
    %2285 = vst.msk [vmem:[#allocation10] sm:$0xff] %vm2284, %v2276
    %2286 = vst.msk [vmem:[#allocation10 + $0x8] sm:$0xff] %vm2284, %v2277
    %2287 = vst.msk [vmem:[#allocation10 + $0x10] sm:$0xff] %vm2284, %v2278
    %2288 = vst.msk [vmem:[#allocation10 + $0x18] sm:$0xff] %vm2284, %v2279
    %2289 = vst.msk [vmem:[#allocation10 + $0x20] sm:$0xff] %vm2284, %v2280
    %2290 = vst.msk [vmem:[#allocation10 + $0x28] sm:$0xff] %vm2284, %v2281
    %2291 = vst.msk [vmem:[#allocation10 + $0x30] sm:$0xff] %vm2284, %v2282
    %2292 = vst.msk [vmem:[#allocation10 + $0x38] sm:$0xff] %vm2284, %v2283
    // Predicated region
    $region34: #{tpu_custom_call.1} parent=1 // pred_check
      _
    $region35: #{tpu_custom_call.1} parent=1 // pred_check_branch
      %2294 = sbr.rel (0) target = $region37
    $region36: #{tpu_custom_call.1} parent=1 // pred_region
      %2296 = vsyncadd [#allocation4], 0
      %s2297 = sshll.u32 [#allocation10], 4
      %s2298 = int_to_ptr.vmem [resolvable:$true] %s2297
      %s2299 = sshll.u32 %s4, 4
      %s2300 = int_to_ptr.hbm [resolvable:$true] %s2299
      %2305 = dma.vmem_to_hbm [thread:$0]  %s2298, 1024, %s2300, [#allocation4], 128, 128, 8
    $region37: #{tpu_custom_call.1} parent=1 // pred_fallthru
      _
    // Predicated region
    $region38: #{tpu_custom_call.1} parent=1 // pred_check
      _
    $region39: #{tpu_custom_call.1} parent=1 // pred_check_branch
      %2307 = sbr.rel (0) target = $region41
    $region40: #{tpu_custom_call.1} parent=1 // pred_region
      %2309 = dma.done [#allocation4], 1024
    $region41: #{tpu_custom_call.1} parent=1 // pred_fallthru
      _
    %2310 = vsyncpa [#allocation3], 1
    %2311 = vsyncpa [#allocation6], 1
    %2312 = vsyncpa [#allocation9], 1
    %2313 = vsyncpa [#allocation4], 1

</llo_original>
